<compile_context>
chip_gen: v5e
topology: v5e:2x2
jax: 0.10.0
libtpu: 0.0.40
codegen_flags: <defaults>
</compile_context>

<pallas_src>
import jax
import jax.numpy as jnp
import numpy as np
from jax import lax
from jax.experimental import pallas as pl
from jax.experimental.pallas import tpu as pltpu

# ----------------------------- model dims (small) -----------------------------
T = 8            # sequence length
B = 8            # batch
E = 128          # embedding dim (edim; shrunk from 512 for the small example)
H = 32           # hidden dim (hdim)
NLAYER = 2
VOCAB = 50
VOCAB_PAD = 128  # vocab padded to a full lane tile for the one-hot gather matmul
PAD_IDX = 0


# ------------------------------- Pallas kernel --------------------------------
def encoder_kernel(ids_ref,        # (T*B, 1) int32 token ids
                   table_ref,      # (VOCAB_PAD, 4H) f32: emb_pad @ Wih0.T + b0 (pre-folded)
                   wrec_ref,       # (2H, 8H) f32: blockdiag(Whh0.T, Whh1.T)
                   w1x_ref,        # (H, 4H)  f32: Wih1.T
                   b1_ref,         # (1, 4H)  f32: bih1 + bhh1
                   out_ref):       # (B, 4H)  f32: lane-packed [h1 | h2 | c1 | c2]
    f32 = jnp.float32

    # ---- fused gather + layer-0 input projection in ONE matmul ----
    # one-hot (T*B, VOCAB_PAD) @ table (VOCAB_PAD, 4H)  ->  xproj0 (T*B, 4H)
    # (one-hot rows sum to 1, so the pre-folded bias comes through exactly)
    ids = ids_ref[...]                                                    # (T*B, 1)
    onehot = (ids == lax.broadcasted_iota(jnp.int32, (T * B, VOCAB_PAD), 1)).astype(f32)
    xproj0 = jnp.dot(onehot, table_ref[...], preferred_element_type=f32)  # (T*B, 4H)

    # ---- loop-invariant weight / bias loads (hoisted) ----
    w_rec = wrec_ref[...]                                   # (2H, 8H) block-diagonal
    w1x = w1x_ref[...]                                      # (H, 4H)
    b1 = jnp.broadcast_to(b1_ref[...], (B, 4 * H))          # broadcast once, not per step

    def gates_to_hc(gates, c):
        # sigmoid(x) = 0.5*tanh(0.5*x)+0.5 (exact) -> one EUP push per vreg;
        # one sigmoid + one tanh over the full (B, 128) vreg, then 32-lane slices.
        sig = 0.5 * jnp.tanh(0.5 * gates) + 0.5
        tnh = jnp.tanh(gates)
        i = sig[:, 0 * H:1 * H]
        f = sig[:, 1 * H:2 * H]
        g = tnh[:, 2 * H:3 * H]
        o = sig[:, 3 * H:4 * H]
        c_new = f * c + i * g
        h_new = o * jnp.tanh(c_new)
        return h_new, c_new

    z = jnp.zeros((B, H), f32)
    h1, c1, h2, c2 = z, z, z, z

    # Fully unrolled time loop (T is small & static).  Per-step serial work:
    # one merged 256-wide recurrent dot + one small h1@W1x dot + gate math.
    for t in range(T):
        # merged previous-state recurrence: [h1|h2] @ blockdiag(Whh0.T, Whh1.T)
        hh = jnp.concatenate([h1, h2], axis=1)                        # (B, 2H)
        rec = jnp.dot(hh, w_rec, preferred_element_type=f32)          # (B, 8H)

        # layer 0: precomputed x-projection (+bias) + recurrent term
        g0 = xproj0[t * B:(t + 1) * B, :] + rec[:, :4 * H]
        h1, c1 = gates_to_hc(g0, c1)

        # layer 1: input is layer-0 hidden at the same step; recurrent term
        # (prev h2 @ Whh1.T) already sits in rec[:, 4H:]
        g1 = jnp.dot(h1, w1x, preferred_element_type=f32) + rec[:, 4 * H:] + b1
        h2, c2 = gates_to_hc(g1, c2)

    # single lane-dense (8, 128) store: [h1 | h2 | c1 | c2]
    out_ref[...] = jnp.concatenate([h1, h2, c1, c2], axis=1).astype(out_ref.dtype)


def encoder_forward(x_ids, params):
    """x_ids: (T, B) int32.  Returns (h_T, c_T) each (NLAYER, B, H) float32."""
    # Pad the embedding table to a full 128-row lane tile (extra rows are zero and
    # never selected since ids < VOCAB); pad row PAD_IDX stays zero as in nn.Embedding.
    emb_pad = jnp.zeros((VOCAB_PAD, E), jnp.float32).at[:VOCAB].set(params["emb"])

    # Pre-fold embedding + layer-0 input projection + fused layer-0 bias into one
    # (VOCAB_PAD, 4H) table.  Exact because one-hot rows select exactly one row.
    b0 = (params["bih0"] + params["bhh0"]).reshape(1, 4 * H)
    table = emb_pad @ params["wih0"].T + b0                    # (VOCAB_PAD, 4H)

    # Block-diagonal merged recurrent weight: [h1|h2] @ W_rec == [h1@Whh0.T | h2@Whh1.T]
    w_rec = jnp.zeros((2 * H, 8 * H), jnp.float32)
    w_rec = w_rec.at[:H, :4 * H].set(params["whh0"].T)
    w_rec = w_rec.at[H:, 4 * H:].set(params["whh1"].T)

    w1x = params["wih1"].T                                     # (H, 4H)
    b1 = (params["bih1"] + params["bhh1"]).reshape(1, 4 * H)

    ids_col = x_ids.reshape(T * B, 1).astype(jnp.int32)

    grid_spec = pltpu.PrefetchScalarGridSpec(
        num_scalar_prefetch=0,
        grid=(1,),                                             # single invocation; loop over T in-kernel
        in_specs=[
            pl.BlockSpec((T * B, 1), lambda i: (0, 0)),
            pl.BlockSpec((VOCAB_PAD, 4 * H), lambda i: (0, 0)),
            pl.BlockSpec((2 * H, 8 * H), lambda i: (0, 0)),
            pl.BlockSpec((H, 4 * H), lambda i: (0, 0)),
            pl.BlockSpec((1, 4 * H), lambda i: (0, 0)),
        ],
        out_specs=pl.BlockSpec((B, 4 * H), lambda i: (0, 0)),  # one lane-dense output
    )

    packed = pl.pallas_call(
        encoder_kernel,
        out_shape=jax.ShapeDtypeStruct((B, 4 * H), jnp.float32),
        grid_spec=grid_spec,
        compiler_params=pltpu.CompilerParams(
            dimension_semantics=("arbitrary",)),               # recurrence: no parallel grid axis
    )(ids_col, table, w_rec, w1x, b1)

    # Unpack [h1 | h2 | c1 | c2] -> (NLAYER, B, H) each.
    h_T = jnp.stack([packed[:, 0 * H:1 * H], packed[:, 1 * H:2 * H]])
    c_T = jnp.stack([packed[:, 2 * H:3 * H], packed[:, 3 * H:4 * H]])
    return h_T, c_T


# ------------------------- pure-JAX reference (checking) ----------------------
def encoder_reference(x_ids, params):
    x_emb = jnp.take(params["emb"], x_ids, axis=0)             # (T, B, E)

    def cell(x, h, c, wih, whh, bih, bhh):
        gates = x @ wih.T + bih + h @ whh.T + bhh
        i, f, g, o = jnp.split(gates, 4, axis=-1)
        c_new = jax.nn.sigmoid(f) * c + jax.nn.sigmoid(i) * jnp.tanh(g)
        h_new = jax.nn.sigmoid(o) * jnp.tanh(c_new)
        return h_new, c_new

    def step(carry, x_t):
        (h1, c1, h2, c2) = carry
        h1, c1 = cell(x_t, h1, c1, params["wih0"], params["whh0"],
                      params["bih0"], params["bhh0"])
        h2, c2 = cell(h1, h2, c2, params["wih1"], params["whh1"],
                      params["bih1"], params["bhh1"])
        return (h1, c1, h2, c2), None

    z = jnp.zeros((B, H), jnp.float32)
    (h1, c1, h2, c2), _ = lax.scan(step, (z, z, z, z), x_emb)
    return jnp.stack([h1, h2]), jnp.stack([c1, c2])


# ----------------------------------- main --------------------------------------
if __name__ == "__main__":
    key = jax.random.PRNGKey(0)
    keys = jax.random.split(key, 12)

    k = 1.0 / np.sqrt(H)  # PyTorch LSTM init scale U(-1/sqrt(H), 1/sqrt(H))
    params = {
        "emb": jax.random.normal(keys[0], (VOCAB, E), jnp.float32)
               .at[PAD_IDX].set(0.0),                                  # padding_idx row = 0
        "wih0": jax.random.uniform(keys[1], (4 * H, E), jnp.float32, -k, k),
        "whh0": jax.random.uniform(keys[2], (4 * H, H), jnp.float32, -k, k),
        "bih0": jax.random.uniform(keys[3], (4 * H,), jnp.float32, -k, k),
        "bhh0": jax.random.uniform(keys[4], (4 * H,), jnp.float32, -k, k),
        "wih1": jax.random.uniform(keys[5], (4 * H, H), jnp.float32, -k, k),
        "whh1": jax.random.uniform(keys[6], (4 * H, H), jnp.float32, -k, k),
        "bih1": jax.random.uniform(keys[7], (4 * H,), jnp.float32, -k, k),
        "bhh1": jax.random.uniform(keys[8], (4 * H,), jnp.float32, -k, k),
    }

    x_ids = jax.random.randint(keys[9], (T, B), 0, VOCAB, dtype=jnp.int32)

    h_T, c_T = encoder_forward(x_ids, params)
    jax.block_until_ready((h_T, c_T))

    h_ref, c_ref = encoder_reference(x_ids, params)
    np.testing.assert_allclose(np.asarray(h_T), np.asarray(h_ref), atol=1e-5, rtol=1e-5)
    np.testing.assert_allclose(np.asarray(c_T), np.asarray(c_ref), atol=1e-5, rtol=1e-5)

    print("KERNEL_OK")
</pallas_src>

<mosaic_0001>
module attributes {stable_mosaic.version = 11 : i64} {
  func.func @encoder_kernel(%arg0: i32, %arg1: memref<64x1xi32, #tpu.memory_space<vmem>>, %arg2: memref<128x128xf32, #tpu.memory_space<vmem>>, %arg3: memref<64x256xf32, #tpu.memory_space<vmem>>, %arg4: memref<32x128xf32, #tpu.memory_space<vmem>>, %arg5: memref<1x128xf32, #tpu.memory_space<vmem>>, %arg6: memref<8x128xf32, #tpu.memory_space<vmem>>) attributes {dimension_semantics = [#tpu.dimension_semantics<arbitrary>], iteration_bounds = array<i64: 1>, scalar_prefetch = 0 : i64, scratch_operands = 0 : i64, tpu.core_type = #tpu.core_type<tc>, window_params = [{pipeline_mode = #tpu.pipeline_mode<synchronous>, transform_indices = @transform_0, window_bounds = array<i64: 64, 1>}, {pipeline_mode = #tpu.pipeline_mode<synchronous>, transform_indices = @transform_1, window_bounds = array<i64: 128, 128>}, {pipeline_mode = #tpu.pipeline_mode<synchronous>, transform_indices = @transform_2, window_bounds = array<i64: 64, 256>}, {pipeline_mode = #tpu.pipeline_mode<synchronous>, transform_indices = @transform_3, window_bounds = array<i64: 32, 128>}, {pipeline_mode = #tpu.pipeline_mode<synchronous>, transform_indices = @transform_4, window_bounds = array<i64: 1, 128>}, {pipeline_mode = #tpu.pipeline_mode<synchronous>, transform_indices = @transform_5, window_bounds = array<i64: 8, 128>}]} {
    %c0 = arith.constant 0 : index
    %c0_0 = arith.constant 0 : index
    %0 = vector.load %arg1[%c0, %c0_0] : memref<64x1xi32, #tpu.memory_space<vmem>>, vector<64x1xi32>
    %1 = tpu.iota {dimensions = array<i32: 1>} : vector<64x128xi32>
    %2 = vector.broadcast %0 : vector<64x1xi32> to vector<64x128xi32>
    %3 = arith.cmpi eq, %2, %1 : vector<64x128xi32>
    %4 = arith.extui %3 : vector<64x128xi1> to vector<64x128xi32>
    %5 = arith.sitofp %4 : vector<64x128xi32> to vector<64x128xf32>
    %c0_1 = arith.constant 0 : index
    %c0_2 = arith.constant 0 : index
    %6 = vector.load %arg2[%c0_1, %c0_2] : memref<128x128xf32, #tpu.memory_space<vmem>>, vector<128x128xf32>
    %cst = arith.constant dense<0.000000e+00> : vector<64x128xf32>
    %7 = tpu.matmul %5, %6, %cst {dimension_numbers = #tpu.dot_dimension_numbers<[1], [0], [0], [1], [0, 0, 1, 1], [], []>} : vector<64x128xf32>, vector<128x128xf32>, vector<64x128xf32> -> vector<64x128xf32>
    %c0_3 = arith.constant 0 : index
    %c0_4 = arith.constant 0 : index
    %8 = vector.load %arg3[%c0_3, %c0_4] : memref<64x256xf32, #tpu.memory_space<vmem>>, vector<64x256xf32>
    %c0_5 = arith.constant 0 : index
    %c0_6 = arith.constant 0 : index
    %9 = vector.load %arg4[%c0_5, %c0_6] : memref<32x128xf32, #tpu.memory_space<vmem>>, vector<32x128xf32>
    %c0_7 = arith.constant 0 : index
    %c0_8 = arith.constant 0 : index
    %10 = vector.load %arg5[%c0_7, %c0_8] : memref<1x128xf32, #tpu.memory_space<vmem>>, vector<1x128xf32>
    %11 = vector.shape_cast %10 : vector<1x128xf32> to vector<1x128xf32>
    %12 = vector.broadcast %11 : vector<1x128xf32> to vector<8x128xf32>
    %cst_9 = arith.constant 0.000000e+00 : f32
    %13 = vector.broadcast %cst_9 : f32 to vector<8x32xf32>
    %14 = tpu.concatenate %13, %13 in 1 : vector<8x32xf32>, vector<8x32xf32> -> vector<8x64xf32>
    %cst_10 = arith.constant dense<0.000000e+00> : vector<8x256xf32>
    %15 = tpu.matmul %14, %8, %cst_10 {dimension_numbers = #tpu.dot_dimension_numbers<[1], [0], [0], [1], [0, 0, 1, 1], [], []>} : vector<8x64xf32>, vector<64x256xf32>, vector<8x256xf32> -> vector<8x256xf32>
    %16 = vector.extract_strided_slice %7 {offsets = [0, 0], sizes = [8, 128], strides = [1, 1]} : vector<64x128xf32> to vector<8x128xf32>
    %17 = vector.extract_strided_slice %15 {offsets = [0, 0], sizes = [8, 128], strides = [1, 1]} : vector<8x256xf32> to vector<8x128xf32>
    %18 = arith.addf %16, %17 : vector<8x128xf32>
    %cst_11 = arith.constant 5.000000e-01 : f32
    %19 = vector.broadcast %cst_11 : f32 to vector<8x128xf32>
    %20 = arith.mulf %19, %18 : vector<8x128xf32>
    %21 = math.tanh %20 : vector<8x128xf32>
    %cst_12 = arith.constant 5.000000e-01 : f32
    %22 = vector.broadcast %cst_12 : f32 to vector<8x128xf32>
    %23 = arith.mulf %22, %21 : vector<8x128xf32>
    %cst_13 = arith.constant 5.000000e-01 : f32
    %24 = vector.broadcast %cst_13 : f32 to vector<8x128xf32>
    %25 = arith.addf %23, %24 : vector<8x128xf32>
    %26 = math.tanh %18 : vector<8x128xf32>
    %27 = vector.extract_strided_slice %25 {offsets = [0, 0], sizes = [8, 32], strides = [1, 1]} : vector<8x128xf32> to vector<8x32xf32>
    %28 = vector.extract_strided_slice %25 {offsets = [0, 32], sizes = [8, 32], strides = [1, 1]} : vector<8x128xf32> to vector<8x32xf32>
    %29 = vector.extract_strided_slice %26 {offsets = [0, 64], sizes = [8, 32], strides = [1, 1]} : vector<8x128xf32> to vector<8x32xf32>
    %30 = vector.extract_strided_slice %25 {offsets = [0, 96], sizes = [8, 32], strides = [1, 1]} : vector<8x128xf32> to vector<8x32xf32>
    %31 = arith.mulf %28, %13 : vector<8x32xf32>
    %32 = arith.mulf %27, %29 : vector<8x32xf32>
    %33 = arith.addf %31, %32 : vector<8x32xf32>
    %34 = math.tanh %33 : vector<8x32xf32>
    %35 = arith.mulf %30, %34 : vector<8x32xf32>
    %cst_14 = arith.constant dense<0.000000e+00> : vector<8x128xf32>
    %36 = tpu.matmul %35, %9, %cst_14 {dimension_numbers = #tpu.dot_dimension_numbers<[1], [0], [0], [1], [0, 0, 1, 1], [], []>} : vector<8x32xf32>, vector<32x128xf32>, vector<8x128xf32> -> vector<8x128xf32>
    %37 = vector.extract_strided_slice %15 {offsets = [0, 128], sizes = [8, 128], strides = [1, 1]} : vector<8x256xf32> to vector<8x128xf32>
    %38 = arith.addf %36, %37 : vector<8x128xf32>
    %39 = arith.addf %38, %12 : vector<8x128xf32>
    %cst_15 = arith.constant 5.000000e-01 : f32
    %40 = vector.broadcast %cst_15 : f32 to vector<8x128xf32>
    %41 = arith.mulf %40, %39 : vector<8x128xf32>
    %42 = math.tanh %41 : vector<8x128xf32>
    %cst_16 = arith.constant 5.000000e-01 : f32
    %43 = vector.broadcast %cst_16 : f32 to vector<8x128xf32>
    %44 = arith.mulf %43, %42 : vector<8x128xf32>
    %cst_17 = arith.constant 5.000000e-01 : f32
    %45 = vector.broadcast %cst_17 : f32 to vector<8x128xf32>
    %46 = arith.addf %44, %45 : vector<8x128xf32>
    %47 = math.tanh %39 : vector<8x128xf32>
    %48 = vector.extract_strided_slice %46 {offsets = [0, 0], sizes = [8, 32], strides = [1, 1]} : vector<8x128xf32> to vector<8x32xf32>
    %49 = vector.extract_strided_slice %46 {offsets = [0, 32], sizes = [8, 32], strides = [1, 1]} : vector<8x128xf32> to vector<8x32xf32>
    %50 = vector.extract_strided_slice %47 {offsets = [0, 64], sizes = [8, 32], strides = [1, 1]} : vector<8x128xf32> to vector<8x32xf32>
    %51 = vector.extract_strided_slice %46 {offsets = [0, 96], sizes = [8, 32], strides = [1, 1]} : vector<8x128xf32> to vector<8x32xf32>
    %52 = arith.mulf %49, %13 : vector<8x32xf32>
    %53 = arith.mulf %48, %50 : vector<8x32xf32>
    %54 = arith.addf %52, %53 : vector<8x32xf32>
    %55 = math.tanh %54 : vector<8x32xf32>
    %56 = arith.mulf %51, %55 : vector<8x32xf32>
    %57 = tpu.concatenate %35, %56 in 1 : vector<8x32xf32>, vector<8x32xf32> -> vector<8x64xf32>
    %cst_18 = arith.constant dense<0.000000e+00> : vector<8x256xf32>
    %58 = tpu.matmul %57, %8, %cst_18 {dimension_numbers = #tpu.dot_dimension_numbers<[1], [0], [0], [1], [0, 0, 1, 1], [], []>} : vector<8x64xf32>, vector<64x256xf32>, vector<8x256xf32> -> vector<8x256xf32>
    %59 = vector.extract_strided_slice %7 {offsets = [8, 0], sizes = [8, 128], strides = [1, 1]} : vector<64x128xf32> to vector<8x128xf32>
    %60 = vector.extract_strided_slice %58 {offsets = [0, 0], sizes = [8, 128], strides = [1, 1]} : vector<8x256xf32> to vector<8x128xf32>
    %61 = arith.addf %59, %60 : vector<8x128xf32>
    %cst_19 = arith.constant 5.000000e-01 : f32
    %62 = vector.broadcast %cst_19 : f32 to vector<8x128xf32>
    %63 = arith.mulf %62, %61 : vector<8x128xf32>
    %64 = math.tanh %63 : vector<8x128xf32>
    %cst_20 = arith.constant 5.000000e-01 : f32
    %65 = vector.broadcast %cst_20 : f32 to vector<8x128xf32>
    %66 = arith.mulf %65, %64 : vector<8x128xf32>
    %cst_21 = arith.constant 5.000000e-01 : f32
    %67 = vector.broadcast %cst_21 : f32 to vector<8x128xf32>
    %68 = arith.addf %66, %67 : vector<8x128xf32>
    %69 = math.tanh %61 : vector<8x128xf32>
    %70 = vector.extract_strided_slice %68 {offsets = [0, 0], sizes = [8, 32], strides = [1, 1]} : vector<8x128xf32> to vector<8x32xf32>
    %71 = vector.extract_strided_slice %68 {offsets = [0, 32], sizes = [8, 32], strides = [1, 1]} : vector<8x128xf32> to vector<8x32xf32>
    %72 = vector.extract_strided_slice %69 {offsets = [0, 64], sizes = [8, 32], strides = [1, 1]} : vector<8x128xf32> to vector<8x32xf32>
    %73 = vector.extract_strided_slice %68 {offsets = [0, 96], sizes = [8, 32], strides = [1, 1]} : vector<8x128xf32> to vector<8x32xf32>
    %74 = arith.mulf %71, %33 : vector<8x32xf32>
    %75 = arith.mulf %70, %72 : vector<8x32xf32>
    %76 = arith.addf %74, %75 : vector<8x32xf32>
    %77 = math.tanh %76 : vector<8x32xf32>
    %78 = arith.mulf %73, %77 : vector<8x32xf32>
    %cst_22 = arith.constant dense<0.000000e+00> : vector<8x128xf32>
    %79 = tpu.matmul %78, %9, %cst_22 {dimension_numbers = #tpu.dot_dimension_numbers<[1], [0], [0], [1], [0, 0, 1, 1], [], []>} : vector<8x32xf32>, vector<32x128xf32>, vector<8x128xf32> -> vector<8x128xf32>
    %80 = vector.extract_strided_slice %58 {offsets = [0, 128], sizes = [8, 128], strides = [1, 1]} : vector<8x256xf32> to vector<8x128xf32>
    %81 = arith.addf %79, %80 : vector<8x128xf32>
    %82 = arith.addf %81, %12 : vector<8x128xf32>
    %cst_23 = arith.constant 5.000000e-01 : f32
    %83 = vector.broadcast %cst_23 : f32 to vector<8x128xf32>
    %84 = arith.mulf %83, %82 : vector<8x128xf32>
    %85 = math.tanh %84 : vector<8x128xf32>
    %cst_24 = arith.constant 5.000000e-01 : f32
    %86 = vector.broadcast %cst_24 : f32 to vector<8x128xf32>
    %87 = arith.mulf %86, %85 : vector<8x128xf32>
    %cst_25 = arith.constant 5.000000e-01 : f32
    %88 = vector.broadcast %cst_25 : f32 to vector<8x128xf32>
    %89 = arith.addf %87, %88 : vector<8x128xf32>
    %90 = math.tanh %82 : vector<8x128xf32>
    %91 = vector.extract_strided_slice %89 {offsets = [0, 0], sizes = [8, 32], strides = [1, 1]} : vector<8x128xf32> to vector<8x32xf32>
    %92 = vector.extract_strided_slice %89 {offsets = [0, 32], sizes = [8, 32], strides = [1, 1]} : vector<8x128xf32> to vector<8x32xf32>
    %93 = vector.extract_strided_slice %90 {offsets = [0, 64], sizes = [8, 32], strides = [1, 1]} : vector<8x128xf32> to vector<8x32xf32>
    %94 = vector.extract_strided_slice %89 {offsets = [0, 96], sizes = [8, 32], strides = [1, 1]} : vector<8x128xf32> to vector<8x32xf32>
    %95 = arith.mulf %92, %54 : vector<8x32xf32>
    %96 = arith.mulf %91, %93 : vector<8x32xf32>
    %97 = arith.addf %95, %96 : vector<8x32xf32>
    %98 = math.tanh %97 : vector<8x32xf32>
    %99 = arith.mulf %94, %98 : vector<8x32xf32>
    %100 = tpu.concatenate %78, %99 in 1 : vector<8x32xf32>, vector<8x32xf32> -> vector<8x64xf32>
    %cst_26 = arith.constant dense<0.000000e+00> : vector<8x256xf32>
    %101 = tpu.matmul %100, %8, %cst_26 {dimension_numbers = #tpu.dot_dimension_numbers<[1], [0], [0], [1], [0, 0, 1, 1], [], []>} : vector<8x64xf32>, vector<64x256xf32>, vector<8x256xf32> -> vector<8x256xf32>
    %102 = vector.extract_strided_slice %7 {offsets = [16, 0], sizes = [8, 128], strides = [1, 1]} : vector<64x128xf32> to vector<8x128xf32>
    %103 = vector.extract_strided_slice %101 {offsets = [0, 0], sizes = [8, 128], strides = [1, 1]} : vector<8x256xf32> to vector<8x128xf32>
    %104 = arith.addf %102, %103 : vector<8x128xf32>
    %cst_27 = arith.constant 5.000000e-01 : f32
    %105 = vector.broadcast %cst_27 : f32 to vector<8x128xf32>
    %106 = arith.mulf %105, %104 : vector<8x128xf32>
    %107 = math.tanh %106 : vector<8x128xf32>
    %cst_28 = arith.constant 5.000000e-01 : f32
    %108 = vector.broadcast %cst_28 : f32 to vector<8x128xf32>
    %109 = arith.mulf %108, %107 : vector<8x128xf32>
    %cst_29 = arith.constant 5.000000e-01 : f32
    %110 = vector.broadcast %cst_29 : f32 to vector<8x128xf32>
    %111 = arith.addf %109, %110 : vector<8x128xf32>
    %112 = math.tanh %104 : vector<8x128xf32>
    %113 = vector.extract_strided_slice %111 {offsets = [0, 0], sizes = [8, 32], strides = [1, 1]} : vector<8x128xf32> to vector<8x32xf32>
    %114 = vector.extract_strided_slice %111 {offsets = [0, 32], sizes = [8, 32], strides = [1, 1]} : vector<8x128xf32> to vector<8x32xf32>
    %115 = vector.extract_strided_slice %112 {offsets = [0, 64], sizes = [8, 32], strides = [1, 1]} : vector<8x128xf32> to vector<8x32xf32>
    %116 = vector.extract_strided_slice %111 {offsets = [0, 96], sizes = [8, 32], strides = [1, 1]} : vector<8x128xf32> to vector<8x32xf32>
    %117 = arith.mulf %114, %76 : vector<8x32xf32>
    %118 = arith.mulf %113, %115 : vector<8x32xf32>
    %119 = arith.addf %117, %118 : vector<8x32xf32>
    %120 = math.tanh %119 : vector<8x32xf32>
    %121 = arith.mulf %116, %120 : vector<8x32xf32>
    %cst_30 = arith.constant dense<0.000000e+00> : vector<8x128xf32>
    %122 = tpu.matmul %121, %9, %cst_30 {dimension_numbers = #tpu.dot_dimension_numbers<[1], [0], [0], [1], [0, 0, 1, 1], [], []>} : vector<8x32xf32>, vector<32x128xf32>, vector<8x128xf32> -> vector<8x128xf32>
    %123 = vector.extract_strided_slice %101 {offsets = [0, 128], sizes = [8, 128], strides = [1, 1]} : vector<8x256xf32> to vector<8x128xf32>
    %124 = arith.addf %122, %123 : vector<8x128xf32>
    %125 = arith.addf %124, %12 : vector<8x128xf32>
    %cst_31 = arith.constant 5.000000e-01 : f32
    %126 = vector.broadcast %cst_31 : f32 to vector<8x128xf32>
    %127 = arith.mulf %126, %125 : vector<8x128xf32>
    %128 = math.tanh %127 : vector<8x128xf32>
    %cst_32 = arith.constant 5.000000e-01 : f32
    %129 = vector.broadcast %cst_32 : f32 to vector<8x128xf32>
    %130 = arith.mulf %129, %128 : vector<8x128xf32>
    %cst_33 = arith.constant 5.000000e-01 : f32
    %131 = vector.broadcast %cst_33 : f32 to vector<8x128xf32>
    %132 = arith.addf %130, %131 : vector<8x128xf32>
    %133 = math.tanh %125 : vector<8x128xf32>
    %134 = vector.extract_strided_slice %132 {offsets = [0, 0], sizes = [8, 32], strides = [1, 1]} : vector<8x128xf32> to vector<8x32xf32>
    %135 = vector.extract_strided_slice %132 {offsets = [0, 32], sizes = [8, 32], strides = [1, 1]} : vector<8x128xf32> to vector<8x32xf32>
    %136 = vector.extract_strided_slice %133 {offsets = [0, 64], sizes = [8, 32], strides = [1, 1]} : vector<8x128xf32> to vector<8x32xf32>
    %137 = vector.extract_strided_slice %132 {offsets = [0, 96], sizes = [8, 32], strides = [1, 1]} : vector<8x128xf32> to vector<8x32xf32>
    %138 = arith.mulf %135, %97 : vector<8x32xf32>
    %139 = arith.mulf %134, %136 : vector<8x32xf32>
    %140 = arith.addf %138, %139 : vector<8x32xf32>
    %141 = math.tanh %140 : vector<8x32xf32>
    %142 = arith.mulf %137, %141 : vector<8x32xf32>
    %143 = tpu.concatenate %121, %142 in 1 : vector<8x32xf32>, vector<8x32xf32> -> vector<8x64xf32>
    %cst_34 = arith.constant dense<0.000000e+00> : vector<8x256xf32>
    %144 = tpu.matmul %143, %8, %cst_34 {dimension_numbers = #tpu.dot_dimension_numbers<[1], [0], [0], [1], [0, 0, 1, 1], [], []>} : vector<8x64xf32>, vector<64x256xf32>, vector<8x256xf32> -> vector<8x256xf32>
    %145 = vector.extract_strided_slice %7 {offsets = [24, 0], sizes = [8, 128], strides = [1, 1]} : vector<64x128xf32> to vector<8x128xf32>
    %146 = vector.extract_strided_slice %144 {offsets = [0, 0], sizes = [8, 128], strides = [1, 1]} : vector<8x256xf32> to vector<8x128xf32>
    %147 = arith.addf %145, %146 : vector<8x128xf32>
    %cst_35 = arith.constant 5.000000e-01 : f32
    %148 = vector.broadcast %cst_35 : f32 to vector<8x128xf32>
    %149 = arith.mulf %148, %147 : vector<8x128xf32>
    %150 = math.tanh %149 : vector<8x128xf32>
    %cst_36 = arith.constant 5.000000e-01 : f32
    %151 = vector.broadcast %cst_36 : f32 to vector<8x128xf32>
    %152 = arith.mulf %151, %150 : vector<8x128xf32>
    %cst_37 = arith.constant 5.000000e-01 : f32
    %153 = vector.broadcast %cst_37 : f32 to vector<8x128xf32>
    %154 = arith.addf %152, %153 : vector<8x128xf32>
    %155 = math.tanh %147 : vector<8x128xf32>
    %156 = vector.extract_strided_slice %154 {offsets = [0, 0], sizes = [8, 32], strides = [1, 1]} : vector<8x128xf32> to vector<8x32xf32>
    %157 = vector.extract_strided_slice %154 {offsets = [0, 32], sizes = [8, 32], strides = [1, 1]} : vector<8x128xf32> to vector<8x32xf32>
    %158 = vector.extract_strided_slice %155 {offsets = [0, 64], sizes = [8, 32], strides = [1, 1]} : vector<8x128xf32> to vector<8x32xf32>
    %159 = vector.extract_strided_slice %154 {offsets = [0, 96], sizes = [8, 32], strides = [1, 1]} : vector<8x128xf32> to vector<8x32xf32>
    %160 = arith.mulf %157, %119 : vector<8x32xf32>
    %161 = arith.mulf %156, %158 : vector<8x32xf32>
    %162 = arith.addf %160, %161 : vector<8x32xf32>
    %163 = math.tanh %162 : vector<8x32xf32>
    %164 = arith.mulf %159, %163 : vector<8x32xf32>
    %cst_38 = arith.constant dense<0.000000e+00> : vector<8x128xf32>
    %165 = tpu.matmul %164, %9, %cst_38 {dimension_numbers = #tpu.dot_dimension_numbers<[1], [0], [0], [1], [0, 0, 1, 1], [], []>} : vector<8x32xf32>, vector<32x128xf32>, vector<8x128xf32> -> vector<8x128xf32>
    %166 = vector.extract_strided_slice %144 {offsets = [0, 128], sizes = [8, 128], strides = [1, 1]} : vector<8x256xf32> to vector<8x128xf32>
    %167 = arith.addf %165, %166 : vector<8x128xf32>
    %168 = arith.addf %167, %12 : vector<8x128xf32>
    %cst_39 = arith.constant 5.000000e-01 : f32
    %169 = vector.broadcast %cst_39 : f32 to vector<8x128xf32>
    %170 = arith.mulf %169, %168 : vector<8x128xf32>
    %171 = math.tanh %170 : vector<8x128xf32>
    %cst_40 = arith.constant 5.000000e-01 : f32
    %172 = vector.broadcast %cst_40 : f32 to vector<8x128xf32>
    %173 = arith.mulf %172, %171 : vector<8x128xf32>
    %cst_41 = arith.constant 5.000000e-01 : f32
    %174 = vector.broadcast %cst_41 : f32 to vector<8x128xf32>
    %175 = arith.addf %173, %174 : vector<8x128xf32>
    %176 = math.tanh %168 : vector<8x128xf32>
    %177 = vector.extract_strided_slice %175 {offsets = [0, 0], sizes = [8, 32], strides = [1, 1]} : vector<8x128xf32> to vector<8x32xf32>
    %178 = vector.extract_strided_slice %175 {offsets = [0, 32], sizes = [8, 32], strides = [1, 1]} : vector<8x128xf32> to vector<8x32xf32>
    %179 = vector.extract_strided_slice %176 {offsets = [0, 64], sizes = [8, 32], strides = [1, 1]} : vector<8x128xf32> to vector<8x32xf32>
    %180 = vector.extract_strided_slice %175 {offsets = [0, 96], sizes = [8, 32], strides = [1, 1]} : vector<8x128xf32> to vector<8x32xf32>
    %181 = arith.mulf %178, %140 : vector<8x32xf32>
    %182 = arith.mulf %177, %179 : vector<8x32xf32>
    %183 = arith.addf %181, %182 : vector<8x32xf32>
    %184 = math.tanh %183 : vector<8x32xf32>
    %185 = arith.mulf %180, %184 : vector<8x32xf32>
    %186 = tpu.concatenate %164, %185 in 1 : vector<8x32xf32>, vector<8x32xf32> -> vector<8x64xf32>
    %cst_42 = arith.constant dense<0.000000e+00> : vector<8x256xf32>
    %187 = tpu.matmul %186, %8, %cst_42 {dimension_numbers = #tpu.dot_dimension_numbers<[1], [0], [0], [1], [0, 0, 1, 1], [], []>} : vector<8x64xf32>, vector<64x256xf32>, vector<8x256xf32> -> vector<8x256xf32>
    %188 = vector.extract_strided_slice %7 {offsets = [32, 0], sizes = [8, 128], strides = [1, 1]} : vector<64x128xf32> to vector<8x128xf32>
    %189 = vector.extract_strided_slice %187 {offsets = [0, 0], sizes = [8, 128], strides = [1, 1]} : vector<8x256xf32> to vector<8x128xf32>
    %190 = arith.addf %188, %189 : vector<8x128xf32>
    %cst_43 = arith.constant 5.000000e-01 : f32
    %191 = vector.broadcast %cst_43 : f32 to vector<8x128xf32>
    %192 = arith.mulf %191, %190 : vector<8x128xf32>
    %193 = math.tanh %192 : vector<8x128xf32>
    %cst_44 = arith.constant 5.000000e-01 : f32
    %194 = vector.broadcast %cst_44 : f32 to vector<8x128xf32>
    %195 = arith.mulf %194, %193 : vector<8x128xf32>
    %cst_45 = arith.constant 5.000000e-01 : f32
    %196 = vector.broadcast %cst_45 : f32 to vector<8x128xf32>
    %197 = arith.addf %195, %196 : vector<8x128xf32>
    %198 = math.tanh %190 : vector<8x128xf32>
    %199 = vector.extract_strided_slice %197 {offsets = [0, 0], sizes = [8, 32], strides = [1, 1]} : vector<8x128xf32> to vector<8x32xf32>
    %200 = vector.extract_strided_slice %197 {offsets = [0, 32], sizes = [8, 32], strides = [1, 1]} : vector<8x128xf32> to vector<8x32xf32>
    %201 = vector.extract_strided_slice %198 {offsets = [0, 64], sizes = [8, 32], strides = [1, 1]} : vector<8x128xf32> to vector<8x32xf32>
    %202 = vector.extract_strided_slice %197 {offsets = [0, 96], sizes = [8, 32], strides = [1, 1]} : vector<8x128xf32> to vector<8x32xf32>
    %203 = arith.mulf %200, %162 : vector<8x32xf32>
    %204 = arith.mulf %199, %201 : vector<8x32xf32>
    %205 = arith.addf %203, %204 : vector<8x32xf32>
    %206 = math.tanh %205 : vector<8x32xf32>
    %207 = arith.mulf %202, %206 : vector<8x32xf32>
    %cst_46 = arith.constant dense<0.000000e+00> : vector<8x128xf32>
    %208 = tpu.matmul %207, %9, %cst_46 {dimension_numbers = #tpu.dot_dimension_numbers<[1], [0], [0], [1], [0, 0, 1, 1], [], []>} : vector<8x32xf32>, vector<32x128xf32>, vector<8x128xf32> -> vector<8x128xf32>
    %209 = vector.extract_strided_slice %187 {offsets = [0, 128], sizes = [8, 128], strides = [1, 1]} : vector<8x256xf32> to vector<8x128xf32>
    %210 = arith.addf %208, %209 : vector<8x128xf32>
    %211 = arith.addf %210, %12 : vector<8x128xf32>
    %cst_47 = arith.constant 5.000000e-01 : f32
    %212 = vector.broadcast %cst_47 : f32 to vector<8x128xf32>
    %213 = arith.mulf %212, %211 : vector<8x128xf32>
    %214 = math.tanh %213 : vector<8x128xf32>
    %cst_48 = arith.constant 5.000000e-01 : f32
    %215 = vector.broadcast %cst_48 : f32 to vector<8x128xf32>
    %216 = arith.mulf %215, %214 : vector<8x128xf32>
    %cst_49 = arith.constant 5.000000e-01 : f32
    %217 = vector.broadcast %cst_49 : f32 to vector<8x128xf32>
    %218 = arith.addf %216, %217 : vector<8x128xf32>
    %219 = math.tanh %211 : vector<8x128xf32>
    %220 = vector.extract_strided_slice %218 {offsets = [0, 0], sizes = [8, 32], strides = [1, 1]} : vector<8x128xf32> to vector<8x32xf32>
    %221 = vector.extract_strided_slice %218 {offsets = [0, 32], sizes = [8, 32], strides = [1, 1]} : vector<8x128xf32> to vector<8x32xf32>
    %222 = vector.extract_strided_slice %219 {offsets = [0, 64], sizes = [8, 32], strides = [1, 1]} : vector<8x128xf32> to vector<8x32xf32>
    %223 = vector.extract_strided_slice %218 {offsets = [0, 96], sizes = [8, 32], strides = [1, 1]} : vector<8x128xf32> to vector<8x32xf32>
    %224 = arith.mulf %221, %183 : vector<8x32xf32>
    %225 = arith.mulf %220, %222 : vector<8x32xf32>
    %226 = arith.addf %224, %225 : vector<8x32xf32>
    %227 = math.tanh %226 : vector<8x32xf32>
    %228 = arith.mulf %223, %227 : vector<8x32xf32>
    %229 = tpu.concatenate %207, %228 in 1 : vector<8x32xf32>, vector<8x32xf32> -> vector<8x64xf32>
    %cst_50 = arith.constant dense<0.000000e+00> : vector<8x256xf32>
    %230 = tpu.matmul %229, %8, %cst_50 {dimension_numbers = #tpu.dot_dimension_numbers<[1], [0], [0], [1], [0, 0, 1, 1], [], []>} : vector<8x64xf32>, vector<64x256xf32>, vector<8x256xf32> -> vector<8x256xf32>
    %231 = vector.extract_strided_slice %7 {offsets = [40, 0], sizes = [8, 128], strides = [1, 1]} : vector<64x128xf32> to vector<8x128xf32>
    %232 = vector.extract_strided_slice %230 {offsets = [0, 0], sizes = [8, 128], strides = [1, 1]} : vector<8x256xf32> to vector<8x128xf32>
    %233 = arith.addf %231, %232 : vector<8x128xf32>
    %cst_51 = arith.constant 5.000000e-01 : f32
    %234 = vector.broadcast %cst_51 : f32 to vector<8x128xf32>
    %235 = arith.mulf %234, %233 : vector<8x128xf32>
    %236 = math.tanh %235 : vector<8x128xf32>
    %cst_52 = arith.constant 5.000000e-01 : f32
    %237 = vector.broadcast %cst_52 : f32 to vector<8x128xf32>
    %238 = arith.mulf %237, %236 : vector<8x128xf32>
    %cst_53 = arith.constant 5.000000e-01 : f32
    %239 = vector.broadcast %cst_53 : f32 to vector<8x128xf32>
    %240 = arith.addf %238, %239 : vector<8x128xf32>
    %241 = math.tanh %233 : vector<8x128xf32>
    %242 = vector.extract_strided_slice %240 {offsets = [0, 0], sizes = [8, 32], strides = [1, 1]} : vector<8x128xf32> to vector<8x32xf32>
    %243 = vector.extract_strided_slice %240 {offsets = [0, 32], sizes = [8, 32], strides = [1, 1]} : vector<8x128xf32> to vector<8x32xf32>
    %244 = vector.extract_strided_slice %241 {offsets = [0, 64], sizes = [8, 32], strides = [1, 1]} : vector<8x128xf32> to vector<8x32xf32>
    %245 = vector.extract_strided_slice %240 {offsets = [0, 96], sizes = [8, 32], strides = [1, 1]} : vector<8x128xf32> to vector<8x32xf32>
    %246 = arith.mulf %243, %205 : vector<8x32xf32>
    %247 = arith.mulf %242, %244 : vector<8x32xf32>
    %248 = arith.addf %246, %247 : vector<8x32xf32>
    %249 = math.tanh %248 : vector<8x32xf32>
    %250 = arith.mulf %245, %249 : vector<8x32xf32>
    %cst_54 = arith.constant dense<0.000000e+00> : vector<8x128xf32>
    %251 = tpu.matmul %250, %9, %cst_54 {dimension_numbers = #tpu.dot_dimension_numbers<[1], [0], [0], [1], [0, 0, 1, 1], [], []>} : vector<8x32xf32>, vector<32x128xf32>, vector<8x128xf32> -> vector<8x128xf32>
    %252 = vector.extract_strided_slice %230 {offsets = [0, 128], sizes = [8, 128], strides = [1, 1]} : vector<8x256xf32> to vector<8x128xf32>
    %253 = arith.addf %251, %252 : vector<8x128xf32>
    %254 = arith.addf %253, %12 : vector<8x128xf32>
    %cst_55 = arith.constant 5.000000e-01 : f32
    %255 = vector.broadcast %cst_55 : f32 to vector<8x128xf32>
    %256 = arith.mulf %255, %254 : vector<8x128xf32>
    %257 = math.tanh %256 : vector<8x128xf32>
    %cst_56 = arith.constant 5.000000e-01 : f32
    %258 = vector.broadcast %cst_56 : f32 to vector<8x128xf32>
    %259 = arith.mulf %258, %257 : vector<8x128xf32>
    %cst_57 = arith.constant 5.000000e-01 : f32
    %260 = vector.broadcast %cst_57 : f32 to vector<8x128xf32>
    %261 = arith.addf %259, %260 : vector<8x128xf32>
    %262 = math.tanh %254 : vector<8x128xf32>
    %263 = vector.extract_strided_slice %261 {offsets = [0, 0], sizes = [8, 32], strides = [1, 1]} : vector<8x128xf32> to vector<8x32xf32>
    %264 = vector.extract_strided_slice %261 {offsets = [0, 32], sizes = [8, 32], strides = [1, 1]} : vector<8x128xf32> to vector<8x32xf32>
    %265 = vector.extract_strided_slice %262 {offsets = [0, 64], sizes = [8, 32], strides = [1, 1]} : vector<8x128xf32> to vector<8x32xf32>
    %266 = vector.extract_strided_slice %261 {offsets = [0, 96], sizes = [8, 32], strides = [1, 1]} : vector<8x128xf32> to vector<8x32xf32>
    %267 = arith.mulf %264, %226 : vector<8x32xf32>
    %268 = arith.mulf %263, %265 : vector<8x32xf32>
    %269 = arith.addf %267, %268 : vector<8x32xf32>
    %270 = math.tanh %269 : vector<8x32xf32>
    %271 = arith.mulf %266, %270 : vector<8x32xf32>
    %272 = tpu.concatenate %250, %271 in 1 : vector<8x32xf32>, vector<8x32xf32> -> vector<8x64xf32>
    %cst_58 = arith.constant dense<0.000000e+00> : vector<8x256xf32>
    %273 = tpu.matmul %272, %8, %cst_58 {dimension_numbers = #tpu.dot_dimension_numbers<[1], [0], [0], [1], [0, 0, 1, 1], [], []>} : vector<8x64xf32>, vector<64x256xf32>, vector<8x256xf32> -> vector<8x256xf32>
    %274 = vector.extract_strided_slice %7 {offsets = [48, 0], sizes = [8, 128], strides = [1, 1]} : vector<64x128xf32> to vector<8x128xf32>
    %275 = vector.extract_strided_slice %273 {offsets = [0, 0], sizes = [8, 128], strides = [1, 1]} : vector<8x256xf32> to vector<8x128xf32>
    %276 = arith.addf %274, %275 : vector<8x128xf32>
    %cst_59 = arith.constant 5.000000e-01 : f32
    %277 = vector.broadcast %cst_59 : f32 to vector<8x128xf32>
    %278 = arith.mulf %277, %276 : vector<8x128xf32>
    %279 = math.tanh %278 : vector<8x128xf32>
    %cst_60 = arith.constant 5.000000e-01 : f32
    %280 = vector.broadcast %cst_60 : f32 to vector<8x128xf32>
    %281 = arith.mulf %280, %279 : vector<8x128xf32>
    %cst_61 = arith.constant 5.000000e-01 : f32
    %282 = vector.broadcast %cst_61 : f32 to vector<8x128xf32>
    %283 = arith.addf %281, %282 : vector<8x128xf32>
    %284 = math.tanh %276 : vector<8x128xf32>
    %285 = vector.extract_strided_slice %283 {offsets = [0, 0], sizes = [8, 32], strides = [1, 1]} : vector<8x128xf32> to vector<8x32xf32>
    %286 = vector.extract_strided_slice %283 {offsets = [0, 32], sizes = [8, 32], strides = [1, 1]} : vector<8x128xf32> to vector<8x32xf32>
    %287 = vector.extract_strided_slice %284 {offsets = [0, 64], sizes = [8, 32], strides = [1, 1]} : vector<8x128xf32> to vector<8x32xf32>
    %288 = vector.extract_strided_slice %283 {offsets = [0, 96], sizes = [8, 32], strides = [1, 1]} : vector<8x128xf32> to vector<8x32xf32>
    %289 = arith.mulf %286, %248 : vector<8x32xf32>
    %290 = arith.mulf %285, %287 : vector<8x32xf32>
    %291 = arith.addf %289, %290 : vector<8x32xf32>
    %292 = math.tanh %291 : vector<8x32xf32>
    %293 = arith.mulf %288, %292 : vector<8x32xf32>
    %cst_62 = arith.constant dense<0.000000e+00> : vector<8x128xf32>
    %294 = tpu.matmul %293, %9, %cst_62 {dimension_numbers = #tpu.dot_dimension_numbers<[1], [0], [0], [1], [0, 0, 1, 1], [], []>} : vector<8x32xf32>, vector<32x128xf32>, vector<8x128xf32> -> vector<8x128xf32>
    %295 = vector.extract_strided_slice %273 {offsets = [0, 128], sizes = [8, 128], strides = [1, 1]} : vector<8x256xf32> to vector<8x128xf32>
    %296 = arith.addf %294, %295 : vector<8x128xf32>
    %297 = arith.addf %296, %12 : vector<8x128xf32>
    %cst_63 = arith.constant 5.000000e-01 : f32
    %298 = vector.broadcast %cst_63 : f32 to vector<8x128xf32>
    %299 = arith.mulf %298, %297 : vector<8x128xf32>
    %300 = math.tanh %299 : vector<8x128xf32>
    %cst_64 = arith.constant 5.000000e-01 : f32
    %301 = vector.broadcast %cst_64 : f32 to vector<8x128xf32>
    %302 = arith.mulf %301, %300 : vector<8x128xf32>
    %cst_65 = arith.constant 5.000000e-01 : f32
    %303 = vector.broadcast %cst_65 : f32 to vector<8x128xf32>
    %304 = arith.addf %302, %303 : vector<8x128xf32>
    %305 = math.tanh %297 : vector<8x128xf32>
    %306 = vector.extract_strided_slice %304 {offsets = [0, 0], sizes = [8, 32], strides = [1, 1]} : vector<8x128xf32> to vector<8x32xf32>
    %307 = vector.extract_strided_slice %304 {offsets = [0, 32], sizes = [8, 32], strides = [1, 1]} : vector<8x128xf32> to vector<8x32xf32>
    %308 = vector.extract_strided_slice %305 {offsets = [0, 64], sizes = [8, 32], strides = [1, 1]} : vector<8x128xf32> to vector<8x32xf32>
    %309 = vector.extract_strided_slice %304 {offsets = [0, 96], sizes = [8, 32], strides = [1, 1]} : vector<8x128xf32> to vector<8x32xf32>
    %310 = arith.mulf %307, %269 : vector<8x32xf32>
    %311 = arith.mulf %306, %308 : vector<8x32xf32>
    %312 = arith.addf %310, %311 : vector<8x32xf32>
    %313 = math.tanh %312 : vector<8x32xf32>
    %314 = arith.mulf %309, %313 : vector<8x32xf32>
    %315 = tpu.concatenate %293, %314 in 1 : vector<8x32xf32>, vector<8x32xf32> -> vector<8x64xf32>
    %cst_66 = arith.constant dense<0.000000e+00> : vector<8x256xf32>
    %316 = tpu.matmul %315, %8, %cst_66 {dimension_numbers = #tpu.dot_dimension_numbers<[1], [0], [0], [1], [0, 0, 1, 1], [], []>} : vector<8x64xf32>, vector<64x256xf32>, vector<8x256xf32> -> vector<8x256xf32>
    %317 = vector.extract_strided_slice %7 {offsets = [56, 0], sizes = [8, 128], strides = [1, 1]} : vector<64x128xf32> to vector<8x128xf32>
    %318 = vector.extract_strided_slice %316 {offsets = [0, 0], sizes = [8, 128], strides = [1, 1]} : vector<8x256xf32> to vector<8x128xf32>
    %319 = arith.addf %317, %318 : vector<8x128xf32>
    %cst_67 = arith.constant 5.000000e-01 : f32
    %320 = vector.broadcast %cst_67 : f32 to vector<8x128xf32>
    %321 = arith.mulf %320, %319 : vector<8x128xf32>
    %322 = math.tanh %321 : vector<8x128xf32>
    %cst_68 = arith.constant 5.000000e-01 : f32
    %323 = vector.broadcast %cst_68 : f32 to vector<8x128xf32>
    %324 = arith.mulf %323, %322 : vector<8x128xf32>
    %cst_69 = arith.constant 5.000000e-01 : f32
    %325 = vector.broadcast %cst_69 : f32 to vector<8x128xf32>
    %326 = arith.addf %324, %325 : vector<8x128xf32>
    %327 = math.tanh %319 : vector<8x128xf32>
    %328 = vector.extract_strided_slice %326 {offsets = [0, 0], sizes = [8, 32], strides = [1, 1]} : vector<8x128xf32> to vector<8x32xf32>
    %329 = vector.extract_strided_slice %326 {offsets = [0, 32], sizes = [8, 32], strides = [1, 1]} : vector<8x128xf32> to vector<8x32xf32>
    %330 = vector.extract_strided_slice %327 {offsets = [0, 64], sizes = [8, 32], strides = [1, 1]} : vector<8x128xf32> to vector<8x32xf32>
    %331 = vector.extract_strided_slice %326 {offsets = [0, 96], sizes = [8, 32], strides = [1, 1]} : vector<8x128xf32> to vector<8x32xf32>
    %332 = arith.mulf %329, %291 : vector<8x32xf32>
    %333 = arith.mulf %328, %330 : vector<8x32xf32>
    %334 = arith.addf %332, %333 : vector<8x32xf32>
    %335 = math.tanh %334 : vector<8x32xf32>
    %336 = arith.mulf %331, %335 : vector<8x32xf32>
    %cst_70 = arith.constant dense<0.000000e+00> : vector<8x128xf32>
    %337 = tpu.matmul %336, %9, %cst_70 {dimension_numbers = #tpu.dot_dimension_numbers<[1], [0], [0], [1], [0, 0, 1, 1], [], []>} : vector<8x32xf32>, vector<32x128xf32>, vector<8x128xf32> -> vector<8x128xf32>
    %338 = vector.extract_strided_slice %316 {offsets = [0, 128], sizes = [8, 128], strides = [1, 1]} : vector<8x256xf32> to vector<8x128xf32>
    %339 = arith.addf %337, %338 : vector<8x128xf32>
    %340 = arith.addf %339, %12 : vector<8x128xf32>
    %cst_71 = arith.constant 5.000000e-01 : f32
    %341 = vector.broadcast %cst_71 : f32 to vector<8x128xf32>
    %342 = arith.mulf %341, %340 : vector<8x128xf32>
    %343 = math.tanh %342 : vector<8x128xf32>
    %cst_72 = arith.constant 5.000000e-01 : f32
    %344 = vector.broadcast %cst_72 : f32 to vector<8x128xf32>
    %345 = arith.mulf %344, %343 : vector<8x128xf32>
    %cst_73 = arith.constant 5.000000e-01 : f32
    %346 = vector.broadcast %cst_73 : f32 to vector<8x128xf32>
    %347 = arith.addf %345, %346 : vector<8x128xf32>
    %348 = math.tanh %340 : vector<8x128xf32>
    %349 = vector.extract_strided_slice %347 {offsets = [0, 0], sizes = [8, 32], strides = [1, 1]} : vector<8x128xf32> to vector<8x32xf32>
    %350 = vector.extract_strided_slice %347 {offsets = [0, 32], sizes = [8, 32], strides = [1, 1]} : vector<8x128xf32> to vector<8x32xf32>
    %351 = vector.extract_strided_slice %348 {offsets = [0, 64], sizes = [8, 32], strides = [1, 1]} : vector<8x128xf32> to vector<8x32xf32>
    %352 = vector.extract_strided_slice %347 {offsets = [0, 96], sizes = [8, 32], strides = [1, 1]} : vector<8x128xf32> to vector<8x32xf32>
    %353 = arith.mulf %350, %312 : vector<8x32xf32>
    %354 = arith.mulf %349, %351 : vector<8x32xf32>
    %355 = arith.addf %353, %354 : vector<8x32xf32>
    %356 = math.tanh %355 : vector<8x32xf32>
    %357 = arith.mulf %352, %356 : vector<8x32xf32>
    %358 = tpu.concatenate %336, %357, %334, %355 in 1 : vector<8x32xf32>, vector<8x32xf32>, vector<8x32xf32>, vector<8x32xf32> -> vector<8x128xf32>
    %c0_74 = arith.constant 0 : index
    %c0_75 = arith.constant 0 : index
    %359 = vector.load %arg6[%c0_74, %c0_75] : memref<8x128xf32, #tpu.memory_space<vmem>>, vector<8x128xf32>
    tpu.vector_store %arg6[%c0_74, %c0_75], %358 {strides = array<i32>} : memref<8x128xf32, #tpu.memory_space<vmem>>, vector<8x128xf32>,
    return
  }
  func.func @transform_0(%arg0: i32) -> (i32, i32) {
    %c0_i32 = arith.constant 0 : i32
    %c0_i32_0 = arith.constant 0 : i32
    %c0_i32_1 = arith.constant 0 : i32
    return %c0_i32, %c0_i32_0 : i32, i32
  }
  func.func @transform_1(%arg0: i32) -> (i32, i32) {
    %c0_i32 = arith.constant 0 : i32
    %c0_i32_0 = arith.constant 0 : i32
    %c0_i32_1 = arith.constant 0 : i32
    return %c0_i32, %c0_i32_0 : i32, i32
  }
  func.func @transform_2(%arg0: i32) -> (i32, i32) {
    %c0_i32 = arith.constant 0 : i32
    %c0_i32_0 = arith.constant 0 : i32
    %c0_i32_1 = arith.constant 0 : i32
    return %c0_i32, %c0_i32_0 : i32, i32
  }
  func.func @transform_3(%arg0: i32) -> (i32, i32) {
    %c0_i32 = arith.constant 0 : i32
    %c0_i32_0 = arith.constant 0 : i32
    %c0_i32_1 = arith.constant 0 : i32
    return %c0_i32, %c0_i32_0 : i32, i32
  }
  func.func @transform_4(%arg0: i32) -> (i32, i32) {
    %c0_i32 = arith.constant 0 : i32
    %c0_i32_0 = arith.constant 0 : i32
    %c0_i32_1 = arith.constant 0 : i32
    return %c0_i32, %c0_i32_0 : i32, i32
  }
  func.func @transform_5(%arg0: i32) -> (i32, i32) {
    %c0_i32 = arith.constant 0 : i32
    %c0_i32_0 = arith.constant 0 : i32
    %c0_i32_1 = arith.constant 0 : i32
    return %c0_i32, %c0_i32_0 : i32, i32
  }
}

</mosaic_0001>

<llo_original>
// kernel: tpu_custom_call.1
$region0: #{tpu_custom_call.1}
  #allocation0 [shape = 'u32[]', space=smem, size = 0x4, offset = 0x4, fixed_abs, tag = 'smem constant byte address 0x4 - core index']
  #allocation1 [shape = 'u32[72,128]{1,0:T(1,128)}', space=vmem, size = 0x9000, scoped, tag = 'internal scratch']
  %s0 = inlined_call_operand.vmem [shape: s32[64,1], index: 0, kind: input, shape index: {}]
  %s1 = inlined_call_operand.hbm [shape: f32[128,128], index: 1, kind: input, shape index: {}]
  %s2 = inlined_call_operand.hbm [shape: f32[64,256], index: 2, kind: input, shape index: {}]
  %s3 = inlined_call_operand.vmem [shape: f32[32,128], index: 3, kind: input, shape index: {}]
  %s4 = inlined_call_operand.vmem [shape: f32[1,128], index: 4, kind: input, shape index: {}]
  %s5 = inlined_call_operand.hbm [shape: f32[8,128], index: 5, kind: output, shape index: {}]
  %s6 = sld [smem:[#allocation0]]
  $region38: #{tpu_custom_call.1} parent=0
    _
  %s8 = ssub.s32 1, %s6
  %s9 = scalar_select 0, %s8, %s6
  $region1: #{tpu_custom_call.1} parent=0
    #allocation2 [shape = 'u8[65536]{0}', space=vmem, size = 0x10000, scoped, tag = 'input window, operand 1, single buffered']
    #allocation3 [shape = 's32[1]{0}', space=sflag, size = 0x4, scoped, tag = 'scoped memory for tpu_custom_call.1']
    #allocation4 [shape = 's32[1]{0}', space=sflag, size = 0x4, scoped, tag = 'scoped memory for tpu_custom_call.1']
    #allocation5 [shape = 'u8[65536]{0}', space=vmem, size = 0x10000, scoped, tag = 'input window, operand 2, single buffered']
    #allocation6 [shape = 's32[1]{0}', space=sflag, size = 0x4, scoped, tag = 'scoped memory for tpu_custom_call.1']
    #allocation7 [shape = 'u8[4096]{0}', space=vmem, size = 0x1000, scoped, tag = 'output window, operand 0, single buffered']
    %10 = vsyncpa [#allocation3], 0
    %11 = vsyncpa [#allocation6], 0
    %12 = vsyncpa [#allocation4], 0
    // Predicated region
    $region2: #{tpu_custom_call.1} parent=1 // pred_check
      _
    $region3: #{tpu_custom_call.1} parent=1 // pred_check_branch
      %14 = sbr.rel (0) target = $region5
    $region4: #{tpu_custom_call.1} parent=1 // pred_region
      _
    $region5: #{tpu_custom_call.1} parent=1 // pred_fallthru
      _
    // Predicated region
    $region6: #{tpu_custom_call.1} parent=1 // pred_check
      _
    $region7: #{tpu_custom_call.1} parent=1 // pred_check_branch
      %16 = sbr.rel (0) target = $region9
    $region8: #{tpu_custom_call.1} parent=1 // pred_region
      %18 = vsyncadd [#allocation3], 0
      %s19 = sshll.u32 %s1, 4
      %s20 = int_to_ptr.hbm [resolvable:$true] %s19
      %s21 = sshll.u32 [#allocation2], 4
      %s22 = int_to_ptr.vmem [resolvable:$true] %s21
      %27 = dma.hbm_to_vmem [thread:$0]  %s20, 2048, %s22, [#allocation3], 128, 128, 8
    $region9: #{tpu_custom_call.1} parent=1 // pred_fallthru
      _
    // Predicated region
    $region10: #{tpu_custom_call.1} parent=1 // pred_check
      _
    $region11: #{tpu_custom_call.1} parent=1 // pred_check_branch
      %29 = sbr.rel (0) target = $region13
    $region12: #{tpu_custom_call.1} parent=1 // pred_region
      %31 = vsyncadd [#allocation6], 0
      %s32 = sshll.u32 %s2, 4
      %s33 = int_to_ptr.hbm [resolvable:$true] %s32
      %s34 = sshll.u32 [#allocation5], 4
      %s35 = int_to_ptr.vmem [resolvable:$true] %s34
      %40 = dma.hbm_to_vmem [thread:$0]  %s33, 2048, %s35, [#allocation6], 256, 256, 16
    $region13: #{tpu_custom_call.1} parent=1 // pred_fallthru
      _
    // Predicated region
    $region14: #{tpu_custom_call.1} parent=1 // pred_check
      _
    $region15: #{tpu_custom_call.1} parent=1 // pred_check_branch
      %42 = sbr.rel (0) target = $region17
    $region16: #{tpu_custom_call.1} parent=1 // pred_region
      _
    $region17: #{tpu_custom_call.1} parent=1 // pred_fallthru
      _
    // Predicated region
    $region18: #{tpu_custom_call.1} parent=1 // pred_check
      _
    $region19: #{tpu_custom_call.1} parent=1 // pred_check_branch
      %44 = sbr.rel (0) target = $region21
    $region20: #{tpu_custom_call.1} parent=1 // pred_region
      _
    $region21: #{tpu_custom_call.1} parent=1 // pred_fallthru
      _
    // Predicated region
    $region22: #{tpu_custom_call.1} parent=1 // pred_check
      _
    $region23: #{tpu_custom_call.1} parent=1 // pred_check_branch
      %46 = sbr.rel (0) target = $region25
    $region24: #{tpu_custom_call.1} parent=1 // pred_region
      %48 = dma.done [#allocation3], 2048
    $region25: #{tpu_custom_call.1} parent=1 // pred_fallthru
      _
    // Predicated region
    $region26: #{tpu_custom_call.1} parent=1 // pred_check
      _
    $region27: #{tpu_custom_call.1} parent=1 // pred_check_branch
      %50 = sbr.rel (0) target = $region29
    $region28: #{tpu_custom_call.1} parent=1 // pred_region
      %52 = dma.done [#allocation6], 2048
    $region29: #{tpu_custom_call.1} parent=1 // pred_fallthru
      _
    %v53 = vld [vmem:[%s0] sm:$0xff]
    %v54 = vld [vmem:[%s0 + $0x8] sm:$0xff]
    %v55 = vld [vmem:[%s0 + $0x10] sm:$0xff]
    %v56 = vld [vmem:[%s0 + $0x18] sm:$0xff]
    %v57 = vld [vmem:[%s0 + $0x20] sm:$0xff]
    %v58 = vld [vmem:[%s0 + $0x28] sm:$0xff]
    %v59 = vld [vmem:[%s0 + $0x30] sm:$0xff]
    %v60 = vld [vmem:[%s0 + $0x38] sm:$0xff]
    %v61 = vlaneseq
    %v62 = vand.u32 %v61, 127
    %63 = vset.pattern.permute.xlu0 0
    %64 = vperm.xlu0 %63, %v53
    %v65 = vpop.permute.xlu0 %64
    %66 = vset.pattern.permute.xlu0 0
    %67 = vperm.xlu0 %66, %v54
    %v68 = vpop.permute.xlu0 %67
    %69 = vset.pattern.permute.xlu0 0
    %70 = vperm.xlu0 %69, %v55
    %v71 = vpop.permute.xlu0 %70
    %72 = vset.pattern.permute.xlu0 0
    %73 = vperm.xlu0 %72, %v56
    %v74 = vpop.permute.xlu0 %73
    %75 = vset.pattern.permute.xlu0 0
    %76 = vperm.xlu0 %75, %v57
    %v77 = vpop.permute.xlu0 %76
    %78 = vset.pattern.permute.xlu0 0
    %79 = vperm.xlu0 %78, %v58
    %v80 = vpop.permute.xlu0 %79
    %81 = vset.pattern.permute.xlu0 0
    %82 = vperm.xlu0 %81, %v59
    %v83 = vpop.permute.xlu0 %82
    %84 = vset.pattern.permute.xlu0 0
    %85 = vperm.xlu0 %84, %v60
    %v86 = vpop.permute.xlu0 %85
    %vm87 = vcmp.eq.s32.totalorder %v65, %v62
    %vm88 = vcmp.eq.s32.totalorder %v68, %v62
    %vm89 = vcmp.eq.s32.totalorder %v71, %v62
    %vm90 = vcmp.eq.s32.totalorder %v74, %v62
    %vm91 = vcmp.eq.s32.totalorder %v77, %v62
    %vm92 = vcmp.eq.s32.totalorder %v80, %v62
    %vm93 = vcmp.eq.s32.totalorder %v83, %v62
    %vm94 = vcmp.eq.s32.totalorder %v86, %v62
    %v95 = vsel %vm87, 1, 0
    %v96 = vsel %vm88, 1, 0
    %v97 = vsel %vm89, 1, 0
    %v98 = vsel %vm90, 1, 0
    %v99 = vsel %vm91, 1, 0
    %v100 = vsel %vm92, 1, 0
    %v101 = vsel %vm93, 1, 0
    %v102 = vsel %vm94, 1, 0
    %v103 = vcvt.s32.f32 %v95
    %v104 = vcvt.s32.f32 %v96
    %v105 = vcvt.s32.f32 %v97
    %v106 = vcvt.s32.f32 %v98
    %v107 = vcvt.s32.f32 %v99
    %v108 = vcvt.s32.f32 %v100
    %v109 = vcvt.s32.f32 %v101
    %v110 = vcvt.s32.f32 %v102
    %v111 = vld [vmem:[#allocation2] sm:$0xff]
    %v112 = vld [vmem:[#allocation2 + $0x8] sm:$0xff]
    %v113 = vld [vmem:[#allocation2 + $0x10] sm:$0xff]
    %v114 = vld [vmem:[#allocation2 + $0x18] sm:$0xff]
    %v115 = vld [vmem:[#allocation2 + $0x20] sm:$0xff]
    %v116 = vld [vmem:[#allocation2 + $0x28] sm:$0xff]
    %v117 = vld [vmem:[#allocation2 + $0x30] sm:$0xff]
    %v118 = vld [vmem:[#allocation2 + $0x38] sm:$0xff]
    %v119 = vld [vmem:[#allocation2 + $0x40] sm:$0xff]
    %v120 = vld [vmem:[#allocation2 + $0x48] sm:$0xff]
    %v121 = vld [vmem:[#allocation2 + $0x50] sm:$0xff]
    %v122 = vld [vmem:[#allocation2 + $0x58] sm:$0xff]
    %v123 = vld [vmem:[#allocation2 + $0x60] sm:$0xff]
    %v124 = vld [vmem:[#allocation2 + $0x68] sm:$0xff]
    %v125 = vld [vmem:[#allocation2 + $0x70] sm:$0xff]
    %v126 = vld [vmem:[#allocation2 + $0x78] sm:$0xff]
    %127 = vmatpush.msra.mxu0 %v126
    %128 = vmatpush.msra.mxu0 %v125
    %129 = vmatpush.msra.mxu0 %v124
    %130 = vmatpush.msra.mxu0 %v123
    %131 = vmatpush.msra.mxu0 %v122
    %132 = vmatpush.msra.mxu0 %v121
    %133 = vmatpush.msra.mxu0 %v120
    %134 = vmatpush.msra.mxu0 %v119
    %135 = vmatpush.msra.mxu0 %v118
    %136 = vmatpush.msra.mxu0 %v117
    %137 = vmatpush.msra.mxu0 %v116
    %138 = vmatpush.msra.mxu0 %v115
    %139 = vmatpush.msra.mxu0 %v114
    %140 = vmatpush.msra.mxu0 %v113
    %141 = vmatpush.msra.mxu0 %v112
    %142 = vmatpush.msra.mxu0 %v111
    %143 = vmatmul.f32.gmra.mxu0 %v103
    %v144 = vpop.f32.mrf.mxu0
    %v145 = vadd.f32 0.0, %v144
    %146 = vmatmul.f32.gmra.mxu0 %v104
    %v147 = vpop.f32.mrf.mxu0
    %v148 = vadd.f32 0.0, %v147
    %149 = vmatmul.f32.gmra.mxu0 %v105
    %v150 = vpop.f32.mrf.mxu0
    %v151 = vadd.f32 0.0, %v150
    %152 = vmatmul.f32.gmra.mxu0 %v106
    %v153 = vpop.f32.mrf.mxu0
    %v154 = vadd.f32 0.0, %v153
    %155 = vmatmul.f32.gmra.mxu0 %v107
    %v156 = vpop.f32.mrf.mxu0
    %v157 = vadd.f32 0.0, %v156
    %158 = vmatmul.f32.gmra.mxu0 %v108
    %v159 = vpop.f32.mrf.mxu0
    %v160 = vadd.f32 0.0, %v159
    %161 = vmatmul.f32.gmra.mxu0 %v109
    %v162 = vpop.f32.mrf.mxu0
    %v163 = vadd.f32 0.0, %v162
    %164 = vmatmul.f32.gmra.mxu0 %v110
    %v165 = vpop.f32.mrf.mxu0
    %v166 = vadd.f32 0.0, %v165
    %167 = vdwg.mxu0
    %v168 = vld [vmem:[#allocation5] sm:$0xff]
    %v169 = vld [vmem:[#allocation5 + $0x8] sm:$0xff]
    %v170 = vld [vmem:[#allocation5 + $0x10] sm:$0xff]
    %v171 = vld [vmem:[#allocation5 + $0x18] sm:$0xff]
    %v172 = vld [vmem:[#allocation5 + $0x20] sm:$0xff]
    %v173 = vld [vmem:[#allocation5 + $0x28] sm:$0xff]
    %v174 = vld [vmem:[#allocation5 + $0x30] sm:$0xff]
    %v175 = vld [vmem:[#allocation5 + $0x38] sm:$0xff]
    %v176 = vld [vmem:[#allocation5 + $0x40] sm:$0xff]
    %v177 = vld [vmem:[#allocation5 + $0x48] sm:$0xff]
    %v178 = vld [vmem:[#allocation5 + $0x50] sm:$0xff]
    %v179 = vld [vmem:[#allocation5 + $0x58] sm:$0xff]
    %v180 = vld [vmem:[#allocation5 + $0x60] sm:$0xff]
    %v181 = vld [vmem:[#allocation5 + $0x68] sm:$0xff]
    %v182 = vld [vmem:[#allocation5 + $0x70] sm:$0xff]
    %v183 = vld [vmem:[#allocation5 + $0x78] sm:$0xff]
    %v184 = vld [vmem:[%s3] sm:$0xff]
    %v185 = vld [vmem:[%s3 + $0x8] sm:$0xff]
    %v186 = vld [vmem:[%s3 + $0x10] sm:$0xff]
    %v187 = vld [vmem:[%s3 + $0x18] sm:$0xff]
    %v188 = vld [vmem:[%s4] sm:$0x1]
    %v190 = vperm.slane %v188, 0
    %vm192 = vcmask 523264
    %v194 = vsel %vm192, 0.0, 0
    %196 = vmatpush.msra.mxu0 0.0
    %197 = vmatpush.msra.mxu0 0.0
    %198 = vmatpush.msra.mxu0 0.0
    %199 = vmatpush.msra.mxu0 0.0
    %200 = vmatpush.msra.mxu0 0.0
    %201 = vmatpush.msra.mxu0 0.0
    %202 = vmatpush.msra.mxu0 0.0
    %203 = vmatpush.msra.mxu0 0.0
    %204 = vmatpush.msra.mxu0 %v182
    %205 = vmatpush.msra.mxu0 %v180
    %206 = vmatpush.msra.mxu0 %v178
    %207 = vmatpush.msra.mxu0 %v176
    %208 = vmatpush.msra.mxu0 %v174
    %209 = vmatpush.msra.mxu0 %v172
    %210 = vmatpush.msra.mxu0 %v170
    %211 = vmatpush.msra.mxu0 %v168
    %212 = vmatmul.f32.gmra.mxu0 %v194
    %v213 = vpop.f32.mrf.mxu0
    %v214 = vadd.f32 0.0, %v213
    %215 = vdwg.mxu0
    %216 = vmatpush.msra.mxu0 0.0
    %217 = vmatpush.msra.mxu0 0.0
    %218 = vmatpush.msra.mxu0 0.0
    %219 = vmatpush.msra.mxu0 0.0
    %220 = vmatpush.msra.mxu0 0.0
    %221 = vmatpush.msra.mxu0 0.0
    %222 = vmatpush.msra.mxu0 0.0
    %223 = vmatpush.msra.mxu0 0.0
    %224 = vmatpush.msra.mxu0 %v183
    %225 = vmatpush.msra.mxu0 %v181
    %226 = vmatpush.msra.mxu0 %v179
    %227 = vmatpush.msra.mxu0 %v177
    %228 = vmatpush.msra.mxu0 %v175
    %229 = vmatpush.msra.mxu0 %v173
    %230 = vmatpush.msra.mxu0 %v171
    %231 = vmatpush.msra.mxu0 %v169
    %232 = vmatmul.f32.gmra.mxu0 %v194
    %v233 = vpop.f32.mrf.mxu0
    %v234 = vadd.f32 0.0, %v233
    %235 = vdwg.mxu0
    %v236 = vadd.f32 %v145, %v214
    %v237 = vmul.f32 %v236, 0.5
    %v238 = vtanh.pop %v237
    %v239 = vmul.f32 %v238, 0.5
    %v240 = vadd.f32 %v239, 0.5
    %v241 = vtanh.pop %v236
    %v242 = vmul.f32 %v240, 0.0
    %244 = vrot.lane.b32.xlu0 %v241, 64
    %v245 = vpop.permute.xlu0 %244
    %v247 = vmul.f32 %v240, %v245
    %249 = vrot.lane.b32.xlu0 %v247, 32
    %v250 = vpop.permute.xlu0 %249
    %v252 = vadd.f32 %v242, %v250
    %v253 = vtanh.pop %v252
    %255 = vrot.lane.b32.xlu0 %v253, 64
    %v256 = vpop.permute.xlu0 %255
    %v258 = vmul.f32 %v240, %v256
    %260 = vrot.lane.b32.xlu0 %v258, 32
    %v261 = vpop.permute.xlu0 %260
    %vm262 = vcmask 261120
    %v263 = vsel %vm262, %v261, 0
    %265 = vmatpush.msra.mxu0 0.0
    %266 = vmatpush.msra.mxu0 0.0
    %267 = vmatpush.msra.mxu0 0.0
    %268 = vmatpush.msra.mxu0 0.0
    %269 = vmatpush.msra.mxu0 0.0
    %270 = vmatpush.msra.mxu0 0.0
    %271 = vmatpush.msra.mxu0 0.0
    %272 = vmatpush.msra.mxu0 0.0
    %273 = vmatpush.msra.mxu0 0.0
    %274 = vmatpush.msra.mxu0 0.0
    %275 = vmatpush.msra.mxu0 0.0
    %276 = vmatpush.msra.mxu0 0.0
    %277 = vmatpush.msra.mxu0 %v187
    %278 = vmatpush.msra.mxu0 %v186
    %279 = vmatpush.msra.mxu0 %v185
    %280 = vmatpush.msra.mxu0 %v184
    %281 = vmatmul.f32.gmra.mxu0 %v263
    %v282 = vpop.f32.mrf.mxu0
    %v283 = vadd.f32 %v234, %v282
    %284 = vdwg.mxu0
    %v285 = vadd.f32 %v283, %v190
    %v286 = vmul.f32 %v285, 0.5
    %v287 = vtanh.pop %v286
    %v288 = vmul.f32 %v287, 0.5
    %v289 = vadd.f32 %v288, 0.5
    %v290 = vtanh.pop %v285
    %v291 = vmul.f32 %v289, 0.0
    %293 = vrot.lane.b32.xlu0 %v290, 64
    %v294 = vpop.permute.xlu0 %293
    %v296 = vmul.f32 %v289, %v294
    %298 = vrot.lane.b32.xlu0 %v296, 32
    %v299 = vpop.permute.xlu0 %298
    %v301 = vadd.f32 %v291, %v299
    %v302 = vtanh.pop %v301
    %304 = vrot.lane.b32.xlu0 %v302, 64
    %v305 = vpop.permute.xlu0 %304
    %v307 = vmul.f32 %v289, %v305
    %310 = vrot.lane.b32.xlu0 %v307, 64
    %v311 = vpop.permute.xlu0 %310
    %v313 = vsel %vm262, %v261, %v311
    %v315 = vsel %vm192, %v313, 0
    %317 = vmatpush.msra.mxu0 0.0
    %318 = vmatpush.msra.mxu0 0.0
    %319 = vmatpush.msra.mxu0 0.0
    %320 = vmatpush.msra.mxu0 0.0
    %321 = vmatpush.msra.mxu0 0.0
    %322 = vmatpush.msra.mxu0 0.0
    %323 = vmatpush.msra.mxu0 0.0
    %324 = vmatpush.msra.mxu0 0.0
    %325 = vmatpush.msra.mxu0 %v182
    %326 = vmatpush.msra.mxu0 %v180
    %327 = vmatpush.msra.mxu0 %v178
    %328 = vmatpush.msra.mxu0 %v176
    %329 = vmatpush.msra.mxu0 %v174
    %330 = vmatpush.msra.mxu0 %v172
    %331 = vmatpush.msra.mxu0 %v170
    %332 = vmatpush.msra.mxu0 %v168
    %333 = vmatmul.f32.gmra.mxu0 %v315
    %v334 = vpop.f32.mrf.mxu0
    %v335 = vadd.f32 0.0, %v334
    %336 = vdwg.mxu0
    %337 = vmatpush.msra.mxu0 0.0
    %338 = vmatpush.msra.mxu0 0.0
    %339 = vmatpush.msra.mxu0 0.0
    %340 = vmatpush.msra.mxu0 0.0
    %341 = vmatpush.msra.mxu0 0.0
    %342 = vmatpush.msra.mxu0 0.0
    %343 = vmatpush.msra.mxu0 0.0
    %344 = vmatpush.msra.mxu0 0.0
    %345 = vmatpush.msra.mxu0 %v183
    %346 = vmatpush.msra.mxu0 %v181
    %347 = vmatpush.msra.mxu0 %v179
    %348 = vmatpush.msra.mxu0 %v177
    %349 = vmatpush.msra.mxu0 %v175
    %350 = vmatpush.msra.mxu0 %v173
    %351 = vmatpush.msra.mxu0 %v171
    %352 = vmatpush.msra.mxu0 %v169
    %353 = vmatmul.f32.gmra.mxu0 %v315
    %v354 = vpop.f32.mrf.mxu0
    %v355 = vadd.f32 0.0, %v354
    %356 = vdwg.mxu0
    %v357 = vadd.f32 %v148, %v335
    %v358 = vmul.f32 %v357, 0.5
    %v359 = vtanh.pop %v358
    %v360 = vmul.f32 %v359, 0.5
    %v361 = vadd.f32 %v360, 0.5
    %v362 = vtanh.pop %v357
    %v363 = vmul.f32 %v361, %v252
    %365 = vrot.lane.b32.xlu0 %v362, 64
    %v366 = vpop.permute.xlu0 %365
    %v368 = vmul.f32 %v361, %v366
    %370 = vrot.lane.b32.xlu0 %v368, 32
    %v371 = vpop.permute.xlu0 %370
    %v373 = vadd.f32 %v363, %v371
    %v374 = vtanh.pop %v373
    %376 = vrot.lane.b32.xlu0 %v374, 64
    %v377 = vpop.permute.xlu0 %376
    %v379 = vmul.f32 %v361, %v377
    %381 = vrot.lane.b32.xlu0 %v379, 32
    %v382 = vpop.permute.xlu0 %381
    %v383 = vsel %vm262, %v382, 0
    %385 = vmatpush.msra.mxu0 0.0
    %386 = vmatpush.msra.mxu0 0.0
    %387 = vmatpush.msra.mxu0 0.0
    %388 = vmatpush.msra.mxu0 0.0
    %389 = vmatpush.msra.mxu0 0.0
    %390 = vmatpush.msra.mxu0 0.0
    %391 = vmatpush.msra.mxu0 0.0
    %392 = vmatpush.msra.mxu0 0.0
    %393 = vmatpush.msra.mxu0 0.0
    %394 = vmatpush.msra.mxu0 0.0
    %395 = vmatpush.msra.mxu0 0.0
    %396 = vmatpush.msra.mxu0 0.0
    %397 = vmatpush.msra.mxu0 %v187
    %398 = vmatpush.msra.mxu0 %v186
    %399 = vmatpush.msra.mxu0 %v185
    %400 = vmatpush.msra.mxu0 %v184
    %401 = vmatmul.f32.gmra.mxu0 %v383
    %v402 = vpop.f32.mrf.mxu0
    %v403 = vadd.f32 %v355, %v402
    %404 = vdwg.mxu0
    %v405 = vadd.f32 %v403, %v190
    %v406 = vmul.f32 %v405, 0.5
    %v407 = vtanh.pop %v406
    %v408 = vmul.f32 %v407, 0.5
    %v409 = vadd.f32 %v408, 0.5
    %v410 = vtanh.pop %v405
    %v411 = vmul.f32 %v409, %v301
    %413 = vrot.lane.b32.xlu0 %v410, 64
    %v414 = vpop.permute.xlu0 %413
    %v416 = vmul.f32 %v409, %v414
    %418 = vrot.lane.b32.xlu0 %v416, 32
    %v419 = vpop.permute.xlu0 %418
    %v421 = vadd.f32 %v411, %v419
    %v422 = vtanh.pop %v421
    %424 = vrot.lane.b32.xlu0 %v422, 64
    %v425 = vpop.permute.xlu0 %424
    %v427 = vmul.f32 %v409, %v425
    %430 = vrot.lane.b32.xlu0 %v427, 64
    %v431 = vpop.permute.xlu0 %430
    %v433 = vsel %vm262, %v382, %v431
    %v435 = vsel %vm192, %v433, 0
    %437 = vmatpush.msra.mxu0 0.0
    %438 = vmatpush.msra.mxu0 0.0
    %439 = vmatpush.msra.mxu0 0.0
    %440 = vmatpush.msra.mxu0 0.0
    %441 = vmatpush.msra.mxu0 0.0
    %442 = vmatpush.msra.mxu0 0.0
    %443 = vmatpush.msra.mxu0 0.0
    %444 = vmatpush.msra.mxu0 0.0
    %445 = vmatpush.msra.mxu0 %v182
    %446 = vmatpush.msra.mxu0 %v180
    %447 = vmatpush.msra.mxu0 %v178
    %448 = vmatpush.msra.mxu0 %v176
    %449 = vmatpush.msra.mxu0 %v174
    %450 = vmatpush.msra.mxu0 %v172
    %451 = vmatpush.msra.mxu0 %v170
    %452 = vmatpush.msra.mxu0 %v168
    %453 = vmatmul.f32.gmra.mxu0 %v435
    %v454 = vpop.f32.mrf.mxu0
    %v455 = vadd.f32 0.0, %v454
    %456 = vdwg.mxu0
    %457 = vmatpush.msra.mxu0 0.0
    %458 = vmatpush.msra.mxu0 0.0
    %459 = vmatpush.msra.mxu0 0.0
    %460 = vmatpush.msra.mxu0 0.0
    %461 = vmatpush.msra.mxu0 0.0
    %462 = vmatpush.msra.mxu0 0.0
    %463 = vmatpush.msra.mxu0 0.0
    %464 = vmatpush.msra.mxu0 0.0
    %465 = vmatpush.msra.mxu0 %v183
    %466 = vmatpush.msra.mxu0 %v181
    %467 = vmatpush.msra.mxu0 %v179
    %468 = vmatpush.msra.mxu0 %v177
    %469 = vmatpush.msra.mxu0 %v175
    %470 = vmatpush.msra.mxu0 %v173
    %471 = vmatpush.msra.mxu0 %v171
    %472 = vmatpush.msra.mxu0 %v169
    %473 = vmatmul.f32.gmra.mxu0 %v435
    %v474 = vpop.f32.mrf.mxu0
    %v475 = vadd.f32 0.0, %v474
    %476 = vdwg.mxu0
    %v477 = vadd.f32 %v151, %v455
    %v478 = vmul.f32 %v477, 0.5
    %v479 = vtanh.pop %v478
    %v480 = vmul.f32 %v479, 0.5
    %v481 = vadd.f32 %v480, 0.5
    %v482 = vtanh.pop %v477
    %v483 = vmul.f32 %v481, %v373
    %485 = vrot.lane.b32.xlu0 %v482, 64
    %v486 = vpop.permute.xlu0 %485
    %v488 = vmul.f32 %v481, %v486
    %490 = vrot.lane.b32.xlu0 %v488, 32
    %v491 = vpop.permute.xlu0 %490
    %v493 = vadd.f32 %v483, %v491
    %v494 = vtanh.pop %v493
    %496 = vrot.lane.b32.xlu0 %v494, 64
    %v497 = vpop.permute.xlu0 %496
    %v499 = vmul.f32 %v481, %v497
    %501 = vrot.lane.b32.xlu0 %v499, 32
    %v502 = vpop.permute.xlu0 %501
    %v503 = vsel %vm262, %v502, 0
    %505 = vmatpush.msra.mxu0 0.0
    %506 = vmatpush.msra.mxu0 0.0
    %507 = vmatpush.msra.mxu0 0.0
    %508 = vmatpush.msra.mxu0 0.0
    %509 = vmatpush.msra.mxu0 0.0
    %510 = vmatpush.msra.mxu0 0.0
    %511 = vmatpush.msra.mxu0 0.0
    %512 = vmatpush.msra.mxu0 0.0
    %513 = vmatpush.msra.mxu0 0.0
    %514 = vmatpush.msra.mxu0 0.0
    %515 = vmatpush.msra.mxu0 0.0
    %516 = vmatpush.msra.mxu0 0.0
    %517 = vmatpush.msra.mxu0 %v187
    %518 = vmatpush.msra.mxu0 %v186
    %519 = vmatpush.msra.mxu0 %v185
    %520 = vmatpush.msra.mxu0 %v184
    %521 = vmatmul.f32.gmra.mxu0 %v503
    %v522 = vpop.f32.mrf.mxu0
    %v523 = vadd.f32 %v475, %v522
    %524 = vdwg.mxu0
    %v525 = vadd.f32 %v523, %v190
    %v526 = vmul.f32 %v525, 0.5
    %v527 = vtanh.pop %v526
    %v528 = vmul.f32 %v527, 0.5
    %v529 = vadd.f32 %v528, 0.5
    %v530 = vtanh.pop %v525
    %v531 = vmul.f32 %v529, %v421
    %533 = vrot.lane.b32.xlu0 %v530, 64
    %v534 = vpop.permute.xlu0 %533
    %v536 = vmul.f32 %v529, %v534
    %538 = vrot.lane.b32.xlu0 %v536, 32
    %v539 = vpop.permute.xlu0 %538
    %v541 = vadd.f32 %v531, %v539
    %v542 = vtanh.pop %v541
    %544 = vrot.lane.b32.xlu0 %v542, 64
    %v545 = vpop.permute.xlu0 %544
    %v547 = vmul.f32 %v529, %v545
    %550 = vrot.lane.b32.xlu0 %v547, 64
    %v551 = vpop.permute.xlu0 %550
    %v553 = vsel %vm262, %v502, %v551
    %v555 = vsel %vm192, %v553, 0
    %557 = vmatpush.msra.mxu0 0.0
    %558 = vmatpush.msra.mxu0 0.0
    %559 = vmatpush.msra.mxu0 0.0
    %560 = vmatpush.msra.mxu0 0.0
    %561 = vmatpush.msra.mxu0 0.0
    %562 = vmatpush.msra.mxu0 0.0
    %563 = vmatpush.msra.mxu0 0.0
    %564 = vmatpush.msra.mxu0 0.0
    %565 = vmatpush.msra.mxu0 %v182
    %566 = vmatpush.msra.mxu0 %v180
    %567 = vmatpush.msra.mxu0 %v178
    %568 = vmatpush.msra.mxu0 %v176
    %569 = vmatpush.msra.mxu0 %v174
    %570 = vmatpush.msra.mxu0 %v172
    %571 = vmatpush.msra.mxu0 %v170
    %572 = vmatpush.msra.mxu0 %v168
    %573 = vmatmul.f32.gmra.mxu0 %v555
    %v574 = vpop.f32.mrf.mxu0
    %v575 = vadd.f32 0.0, %v574
    %576 = vdwg.mxu0
    %577 = vmatpush.msra.mxu0 0.0
    %578 = vmatpush.msra.mxu0 0.0
    %579 = vmatpush.msra.mxu0 0.0
    %580 = vmatpush.msra.mxu0 0.0
    %581 = vmatpush.msra.mxu0 0.0
    %582 = vmatpush.msra.mxu0 0.0
    %583 = vmatpush.msra.mxu0 0.0
    %584 = vmatpush.msra.mxu0 0.0
    %585 = vmatpush.msra.mxu0 %v183
    %586 = vmatpush.msra.mxu0 %v181
    %587 = vmatpush.msra.mxu0 %v179
    %588 = vmatpush.msra.mxu0 %v177
    %589 = vmatpush.msra.mxu0 %v175
    %590 = vmatpush.msra.mxu0 %v173
    %591 = vmatpush.msra.mxu0 %v171
    %592 = vmatpush.msra.mxu0 %v169
    %593 = vmatmul.f32.gmra.mxu0 %v555
    %v594 = vpop.f32.mrf.mxu0
    %v595 = vadd.f32 0.0, %v594
    %596 = vdwg.mxu0
    %v597 = vadd.f32 %v154, %v575
    %v598 = vmul.f32 %v597, 0.5
    %v599 = vtanh.pop %v598
    %v600 = vmul.f32 %v599, 0.5
    %v601 = vadd.f32 %v600, 0.5
    %v602 = vtanh.pop %v597
    %v603 = vmul.f32 %v601, %v493
    %605 = vrot.lane.b32.xlu0 %v602, 64
    %v606 = vpop.permute.xlu0 %605
    %v608 = vmul.f32 %v601, %v606
    %610 = vrot.lane.b32.xlu0 %v608, 32
    %v611 = vpop.permute.xlu0 %610
    %v613 = vadd.f32 %v603, %v611
    %v614 = vtanh.pop %v613
    %616 = vrot.lane.b32.xlu0 %v614, 64
    %v617 = vpop.permute.xlu0 %616
    %v619 = vmul.f32 %v601, %v617
    %621 = vrot.lane.b32.xlu0 %v619, 32
    %v622 = vpop.permute.xlu0 %621
    %v623 = vsel %vm262, %v622, 0
    %625 = vmatpush.msra.mxu0 0.0
    %626 = vmatpush.msra.mxu0 0.0
    %627 = vmatpush.msra.mxu0 0.0
    %628 = vmatpush.msra.mxu0 0.0
    %629 = vmatpush.msra.mxu0 0.0
    %630 = vmatpush.msra.mxu0 0.0
    %631 = vmatpush.msra.mxu0 0.0
    %632 = vmatpush.msra.mxu0 0.0
    %633 = vmatpush.msra.mxu0 0.0
    %634 = vmatpush.msra.mxu0 0.0
    %635 = vmatpush.msra.mxu0 0.0
    %636 = vmatpush.msra.mxu0 0.0
    %637 = vmatpush.msra.mxu0 %v187
    %638 = vmatpush.msra.mxu0 %v186
    %639 = vmatpush.msra.mxu0 %v185
    %640 = vmatpush.msra.mxu0 %v184
    %641 = vmatmul.f32.gmra.mxu0 %v623
    %v642 = vpop.f32.mrf.mxu0
    %v643 = vadd.f32 %v595, %v642
    %644 = vdwg.mxu0
    %v645 = vadd.f32 %v643, %v190
    %v646 = vmul.f32 %v645, 0.5
    %v647 = vtanh.pop %v646
    %v648 = vmul.f32 %v647, 0.5
    %v649 = vadd.f32 %v648, 0.5
    %v650 = vtanh.pop %v645
    %v651 = vmul.f32 %v649, %v541
    %653 = vrot.lane.b32.xlu0 %v650, 64
    %v654 = vpop.permute.xlu0 %653
    %v656 = vmul.f32 %v649, %v654
    %658 = vrot.lane.b32.xlu0 %v656, 32
    %v659 = vpop.permute.xlu0 %658
    %v661 = vadd.f32 %v651, %v659
    %v662 = vtanh.pop %v661
    %664 = vrot.lane.b32.xlu0 %v662, 64
    %v665 = vpop.permute.xlu0 %664
    %v667 = vmul.f32 %v649, %v665
    %670 = vrot.lane.b32.xlu0 %v667, 64
    %v671 = vpop.permute.xlu0 %670
    %v673 = vsel %vm262, %v622, %v671
    %v675 = vsel %vm192, %v673, 0
    %677 = vmatpush.msra.mxu0 0.0
    %678 = vmatpush.msra.mxu0 0.0
    %679 = vmatpush.msra.mxu0 0.0
    %680 = vmatpush.msra.mxu0 0.0
    %681 = vmatpush.msra.mxu0 0.0
    %682 = vmatpush.msra.mxu0 0.0
    %683 = vmatpush.msra.mxu0 0.0
    %684 = vmatpush.msra.mxu0 0.0
    %685 = vmatpush.msra.mxu0 %v182
    %686 = vmatpush.msra.mxu0 %v180
    %687 = vmatpush.msra.mxu0 %v178
    %688 = vmatpush.msra.mxu0 %v176
    %689 = vmatpush.msra.mxu0 %v174
    %690 = vmatpush.msra.mxu0 %v172
    %691 = vmatpush.msra.mxu0 %v170
    %692 = vmatpush.msra.mxu0 %v168
    %693 = vmatmul.f32.gmra.mxu0 %v675
    %v694 = vpop.f32.mrf.mxu0
    %v695 = vadd.f32 0.0, %v694
    %696 = vdwg.mxu0
    %697 = vmatpush.msra.mxu0 0.0
    %698 = vmatpush.msra.mxu0 0.0
    %699 = vmatpush.msra.mxu0 0.0
    %700 = vmatpush.msra.mxu0 0.0
    %701 = vmatpush.msra.mxu0 0.0
    %702 = vmatpush.msra.mxu0 0.0
    %703 = vmatpush.msra.mxu0 0.0
    %704 = vmatpush.msra.mxu0 0.0
    %705 = vmatpush.msra.mxu0 %v183
    %706 = vmatpush.msra.mxu0 %v181
    %707 = vmatpush.msra.mxu0 %v179
    %708 = vmatpush.msra.mxu0 %v177
    %709 = vmatpush.msra.mxu0 %v175
    %710 = vmatpush.msra.mxu0 %v173
    %711 = vmatpush.msra.mxu0 %v171
    %712 = vmatpush.msra.mxu0 %v169
    %713 = vmatmul.f32.gmra.mxu0 %v675
    %v714 = vpop.f32.mrf.mxu0
    %v715 = vadd.f32 0.0, %v714
    %716 = vdwg.mxu0
    %v717 = vadd.f32 %v157, %v695
    %v718 = vmul.f32 %v717, 0.5
    %v719 = vtanh.pop %v718
    %v720 = vmul.f32 %v719, 0.5
    %v721 = vadd.f32 %v720, 0.5
    %v722 = vtanh.pop %v717
    %v723 = vmul.f32 %v721, %v613
    %725 = vrot.lane.b32.xlu0 %v722, 64
    %v726 = vpop.permute.xlu0 %725
    %v728 = vmul.f32 %v721, %v726
    %730 = vrot.lane.b32.xlu0 %v728, 32
    %v731 = vpop.permute.xlu0 %730
    %v733 = vadd.f32 %v723, %v731
    %v734 = vtanh.pop %v733
    %736 = vrot.lane.b32.xlu0 %v734, 64
    %v737 = vpop.permute.xlu0 %736
    %v739 = vmul.f32 %v721, %v737
    %741 = vrot.lane.b32.xlu0 %v739, 32
    %v742 = vpop.permute.xlu0 %741
    %v743 = vsel %vm262, %v742, 0
    %745 = vmatpush.msra.mxu0 0.0
    %746 = vmatpush.msra.mxu0 0.0
    %747 = vmatpush.msra.mxu0 0.0
    %748 = vmatpush.msra.mxu0 0.0
    %749 = vmatpush.msra.mxu0 0.0
    %750 = vmatpush.msra.mxu0 0.0
    %751 = vmatpush.msra.mxu0 0.0
    %752 = vmatpush.msra.mxu0 0.0
    %753 = vmatpush.msra.mxu0 0.0
    %754 = vmatpush.msra.mxu0 0.0
    %755 = vmatpush.msra.mxu0 0.0
    %756 = vmatpush.msra.mxu0 0.0
    %757 = vmatpush.msra.mxu0 %v187
    %758 = vmatpush.msra.mxu0 %v186
    %759 = vmatpush.msra.mxu0 %v185
    %760 = vmatpush.msra.mxu0 %v184
    %761 = vmatmul.f32.gmra.mxu0 %v743
    %v762 = vpop.f32.mrf.mxu0
    %v763 = vadd.f32 %v715, %v762
    %764 = vdwg.mxu0
    %v765 = vadd.f32 %v763, %v190
    %v766 = vmul.f32 %v765, 0.5
    %v767 = vtanh.pop %v766
    %v768 = vmul.f32 %v767, 0.5
    %v769 = vadd.f32 %v768, 0.5
    %v770 = vtanh.pop %v765
    %v771 = vmul.f32 %v769, %v661
    %773 = vrot.lane.b32.xlu0 %v770, 64
    %v774 = vpop.permute.xlu0 %773
    %v776 = vmul.f32 %v769, %v774
    %778 = vrot.lane.b32.xlu0 %v776, 32
    %v779 = vpop.permute.xlu0 %778
    %v781 = vadd.f32 %v771, %v779
    %v782 = vtanh.pop %v781
    %784 = vrot.lane.b32.xlu0 %v782, 64
    %v785 = vpop.permute.xlu0 %784
    %v787 = vmul.f32 %v769, %v785
    %790 = vrot.lane.b32.xlu0 %v787, 64
    %v791 = vpop.permute.xlu0 %790
    %v793 = vsel %vm262, %v742, %v791
    %v795 = vsel %vm192, %v793, 0
    %797 = vmatpush.msra.mxu0 0.0
    %798 = vmatpush.msra.mxu0 0.0
    %799 = vmatpush.msra.mxu0 0.0
    %800 = vmatpush.msra.mxu0 0.0
    %801 = vmatpush.msra.mxu0 0.0
    %802 = vmatpush.msra.mxu0 0.0
    %803 = vmatpush.msra.mxu0 0.0
    %804 = vmatpush.msra.mxu0 0.0
    %805 = vmatpush.msra.mxu0 %v182
    %806 = vmatpush.msra.mxu0 %v180
    %807 = vmatpush.msra.mxu0 %v178
    %808 = vmatpush.msra.mxu0 %v176
    %809 = vmatpush.msra.mxu0 %v174
    %810 = vmatpush.msra.mxu0 %v172
    %811 = vmatpush.msra.mxu0 %v170
    %812 = vmatpush.msra.mxu0 %v168
    %813 = vmatmul.f32.gmra.mxu0 %v795
    %v814 = vpop.f32.mrf.mxu0
    %v815 = vadd.f32 0.0, %v814
    %816 = vdwg.mxu0
    %817 = vmatpush.msra.mxu0 0.0
    %818 = vmatpush.msra.mxu0 0.0
    %819 = vmatpush.msra.mxu0 0.0
    %820 = vmatpush.msra.mxu0 0.0
    %821 = vmatpush.msra.mxu0 0.0
    %822 = vmatpush.msra.mxu0 0.0
    %823 = vmatpush.msra.mxu0 0.0
    %824 = vmatpush.msra.mxu0 0.0
    %825 = vmatpush.msra.mxu0 %v183
    %826 = vmatpush.msra.mxu0 %v181
    %827 = vmatpush.msra.mxu0 %v179
    %828 = vmatpush.msra.mxu0 %v177
    %829 = vmatpush.msra.mxu0 %v175
    %830 = vmatpush.msra.mxu0 %v173
    %831 = vmatpush.msra.mxu0 %v171
    %832 = vmatpush.msra.mxu0 %v169
    %833 = vmatmul.f32.gmra.mxu0 %v795
    %v834 = vpop.f32.mrf.mxu0
    %v835 = vadd.f32 0.0, %v834
    %836 = vdwg.mxu0
    %v837 = vadd.f32 %v160, %v815
    %v838 = vmul.f32 %v837, 0.5
    %v839 = vtanh.pop %v838
    %v840 = vmul.f32 %v839, 0.5
    %v841 = vadd.f32 %v840, 0.5
    %v842 = vtanh.pop %v837
    %v843 = vmul.f32 %v841, %v733
    %845 = vrot.lane.b32.xlu0 %v842, 64
    %v846 = vpop.permute.xlu0 %845
    %v848 = vmul.f32 %v841, %v846
    %850 = vrot.lane.b32.xlu0 %v848, 32
    %v851 = vpop.permute.xlu0 %850
    %v853 = vadd.f32 %v843, %v851
    %v854 = vtanh.pop %v853
    %856 = vrot.lane.b32.xlu0 %v854, 64
    %v857 = vpop.permute.xlu0 %856
    %v859 = vmul.f32 %v841, %v857
    %861 = vrot.lane.b32.xlu0 %v859, 32
    %v862 = vpop.permute.xlu0 %861
    %v863 = vsel %vm262, %v862, 0
    %865 = vmatpush.msra.mxu0 0.0
    %866 = vmatpush.msra.mxu0 0.0
    %867 = vmatpush.msra.mxu0 0.0
    %868 = vmatpush.msra.mxu0 0.0
    %869 = vmatpush.msra.mxu0 0.0
    %870 = vmatpush.msra.mxu0 0.0
    %871 = vmatpush.msra.mxu0 0.0
    %872 = vmatpush.msra.mxu0 0.0
    %873 = vmatpush.msra.mxu0 0.0
    %874 = vmatpush.msra.mxu0 0.0
    %875 = vmatpush.msra.mxu0 0.0
    %876 = vmatpush.msra.mxu0 0.0
    %877 = vmatpush.msra.mxu0 %v187
    %878 = vmatpush.msra.mxu0 %v186
    %879 = vmatpush.msra.mxu0 %v185
    %880 = vmatpush.msra.mxu0 %v184
    %881 = vmatmul.f32.gmra.mxu0 %v863
    %v882 = vpop.f32.mrf.mxu0
    %v883 = vadd.f32 %v835, %v882
    %884 = vdwg.mxu0
    %v885 = vadd.f32 %v883, %v190
    %v886 = vmul.f32 %v885, 0.5
    %v887 = vtanh.pop %v886
    %v888 = vmul.f32 %v887, 0.5
    %v889 = vadd.f32 %v888, 0.5
    %v890 = vtanh.pop %v885
    %v891 = vmul.f32 %v889, %v781
    %893 = vrot.lane.b32.xlu0 %v890, 64
    %v894 = vpop.permute.xlu0 %893
    %v896 = vmul.f32 %v889, %v894
    %898 = vrot.lane.b32.xlu0 %v896, 32
    %v899 = vpop.permute.xlu0 %898
    %v901 = vadd.f32 %v891, %v899
    %v902 = vtanh.pop %v901
    %904 = vrot.lane.b32.xlu0 %v902, 64
    %v905 = vpop.permute.xlu0 %904
    %v907 = vmul.f32 %v889, %v905
    %910 = vrot.lane.b32.xlu0 %v907, 64
    %v911 = vpop.permute.xlu0 %910
    %v913 = vsel %vm262, %v862, %v911
    %v915 = vsel %vm192, %v913, 0
    %917 = vmatpush.msra.mxu0 0.0
    %918 = vmatpush.msra.mxu0 0.0
    %919 = vmatpush.msra.mxu0 0.0
    %920 = vmatpush.msra.mxu0 0.0
    %921 = vmatpush.msra.mxu0 0.0
    %922 = vmatpush.msra.mxu0 0.0
    %923 = vmatpush.msra.mxu0 0.0
    %924 = vmatpush.msra.mxu0 0.0
    %925 = vmatpush.msra.mxu0 %v182
    %926 = vmatpush.msra.mxu0 %v180
    %927 = vmatpush.msra.mxu0 %v178
    %928 = vmatpush.msra.mxu0 %v176
    %929 = vmatpush.msra.mxu0 %v174
    %930 = vmatpush.msra.mxu0 %v172
    %931 = vmatpush.msra.mxu0 %v170
    %932 = vmatpush.msra.mxu0 %v168
    %933 = vmatmul.f32.gmra.mxu0 %v915
    %v934 = vpop.f32.mrf.mxu0
    %v935 = vadd.f32 0.0, %v934
    %936 = vdwg.mxu0
    %937 = vmatpush.msra.mxu0 0.0
    %938 = vmatpush.msra.mxu0 0.0
    %939 = vmatpush.msra.mxu0 0.0
    %940 = vmatpush.msra.mxu0 0.0
    %941 = vmatpush.msra.mxu0 0.0
    %942 = vmatpush.msra.mxu0 0.0
    %943 = vmatpush.msra.mxu0 0.0
    %944 = vmatpush.msra.mxu0 0.0
    %945 = vmatpush.msra.mxu0 %v183
    %946 = vmatpush.msra.mxu0 %v181
    %947 = vmatpush.msra.mxu0 %v179
    %948 = vmatpush.msra.mxu0 %v177
    %949 = vmatpush.msra.mxu0 %v175
    %950 = vmatpush.msra.mxu0 %v173
    %951 = vmatpush.msra.mxu0 %v171
    %952 = vmatpush.msra.mxu0 %v169
    %953 = vmatmul.f32.gmra.mxu0 %v915
    %v954 = vpop.f32.mrf.mxu0
    %v955 = vadd.f32 0.0, %v954
    %956 = vdwg.mxu0
    %v957 = vadd.f32 %v163, %v935
    %v958 = vmul.f32 %v957, 0.5
    %v959 = vtanh.pop %v958
    %v960 = vmul.f32 %v959, 0.5
    %v961 = vadd.f32 %v960, 0.5
    %v962 = vtanh.pop %v957
    %v963 = vmul.f32 %v961, %v853
    %965 = vrot.lane.b32.xlu0 %v962, 64
    %v966 = vpop.permute.xlu0 %965
    %v968 = vmul.f32 %v961, %v966
    %970 = vrot.lane.b32.xlu0 %v968, 32
    %v971 = vpop.permute.xlu0 %970
    %v973 = vadd.f32 %v963, %v971
    %v974 = vtanh.pop %v973
    %976 = vrot.lane.b32.xlu0 %v974, 64
    %v977 = vpop.permute.xlu0 %976
    %v979 = vmul.f32 %v961, %v977
    %981 = vrot.lane.b32.xlu0 %v979, 32
    %v982 = vpop.permute.xlu0 %981
    %v983 = vsel %vm262, %v982, 0
    %985 = vmatpush.msra.mxu0 0.0
    %986 = vmatpush.msra.mxu0 0.0
    %987 = vmatpush.msra.mxu0 0.0
    %988 = vmatpush.msra.mxu0 0.0
    %989 = vmatpush.msra.mxu0 0.0
    %990 = vmatpush.msra.mxu0 0.0
    %991 = vmatpush.msra.mxu0 0.0
    %992 = vmatpush.msra.mxu0 0.0
    %993 = vmatpush.msra.mxu0 0.0
    %994 = vmatpush.msra.mxu0 0.0
    %995 = vmatpush.msra.mxu0 0.0
    %996 = vmatpush.msra.mxu0 0.0
    %997 = vmatpush.msra.mxu0 %v187
    %998 = vmatpush.msra.mxu0 %v186
    %999 = vmatpush.msra.mxu0 %v185
    %1000 = vmatpush.msra.mxu0 %v184
    %1001 = vmatmul.f32.gmra.mxu0 %v983
    %v1002 = vpop.f32.mrf.mxu0
    %v1003 = vadd.f32 %v955, %v1002
    %1004 = vdwg.mxu0
    %v1005 = vadd.f32 %v1003, %v190
    %v1006 = vmul.f32 %v1005, 0.5
    %v1007 = vtanh.pop %v1006
    %v1008 = vmul.f32 %v1007, 0.5
    %v1009 = vadd.f32 %v1008, 0.5
    %v1010 = vtanh.pop %v1005
    %v1011 = vmul.f32 %v1009, %v901
    %1013 = vrot.lane.b32.xlu0 %v1010, 64
    %v1014 = vpop.permute.xlu0 %1013
    %v1016 = vmul.f32 %v1009, %v1014
    %1018 = vrot.lane.b32.xlu0 %v1016, 32
    %v1019 = vpop.permute.xlu0 %1018
    %v1021 = vadd.f32 %v1011, %v1019
    %v1022 = vtanh.pop %v1021
    %1024 = vrot.lane.b32.xlu0 %v1022, 64
    %v1025 = vpop.permute.xlu0 %1024
    %v1027 = vmul.f32 %v1009, %v1025
    %1030 = vrot.lane.b32.xlu0 %v1027, 64
    %v1031 = vpop.permute.xlu0 %1030
    %v1033 = vsel %vm262, %v982, %v1031
    %v1035 = vsel %vm192, %v1033, 0
    %1037 = vmatpush.msra.mxu0 0.0
    %1038 = vmatpush.msra.mxu0 0.0
    %1039 = vmatpush.msra.mxu0 0.0
    %1040 = vmatpush.msra.mxu0 0.0
    %1041 = vmatpush.msra.mxu0 0.0
    %1042 = vmatpush.msra.mxu0 0.0
    %1043 = vmatpush.msra.mxu0 0.0
    %1044 = vmatpush.msra.mxu0 0.0
    %1045 = vmatpush.msra.mxu0 %v182
    %1046 = vmatpush.msra.mxu0 %v180
    %1047 = vmatpush.msra.mxu0 %v178
    %1048 = vmatpush.msra.mxu0 %v176
    %1049 = vmatpush.msra.mxu0 %v174
    %1050 = vmatpush.msra.mxu0 %v172
    %1051 = vmatpush.msra.mxu0 %v170
    %1052 = vmatpush.msra.mxu0 %v168
    %1053 = vmatmul.f32.gmra.mxu0 %v1035
    %v1054 = vpop.f32.mrf.mxu0
    %v1055 = vadd.f32 0.0, %v1054
    %1056 = vdwg.mxu0
    %1057 = vmatpush.msra.mxu0 0.0
    %1058 = vmatpush.msra.mxu0 0.0
    %1059 = vmatpush.msra.mxu0 0.0
    %1060 = vmatpush.msra.mxu0 0.0
    %1061 = vmatpush.msra.mxu0 0.0
    %1062 = vmatpush.msra.mxu0 0.0
    %1063 = vmatpush.msra.mxu0 0.0
    %1064 = vmatpush.msra.mxu0 0.0
    %1065 = vmatpush.msra.mxu0 %v183
    %1066 = vmatpush.msra.mxu0 %v181
    %1067 = vmatpush.msra.mxu0 %v179
    %1068 = vmatpush.msra.mxu0 %v177
    %1069 = vmatpush.msra.mxu0 %v175
    %1070 = vmatpush.msra.mxu0 %v173
    %1071 = vmatpush.msra.mxu0 %v171
    %1072 = vmatpush.msra.mxu0 %v169
    %1073 = vmatmul.f32.gmra.mxu0 %v1035
    %v1074 = vpop.f32.mrf.mxu0
    %v1075 = vadd.f32 0.0, %v1074
    %1076 = vdwg.mxu0
    %v1077 = vadd.f32 %v166, %v1055
    %v1078 = vmul.f32 %v1077, 0.5
    %v1079 = vtanh.pop %v1078
    %v1080 = vmul.f32 %v1079, 0.5
    %v1081 = vadd.f32 %v1080, 0.5
    %v1082 = vtanh.pop %v1077
    %v1083 = vmul.f32 %v1081, %v973
    %1085 = vrot.lane.b32.xlu0 %v1082, 64
    %v1086 = vpop.permute.xlu0 %1085
    %v1088 = vmul.f32 %v1081, %v1086
    %1090 = vrot.lane.b32.xlu0 %v1088, 32
    %v1091 = vpop.permute.xlu0 %1090
    %v1093 = vadd.f32 %v1083, %v1091
    %v1094 = vtanh.pop %v1093
    %1096 = vrot.lane.b32.xlu0 %v1094, 64
    %v1097 = vpop.permute.xlu0 %1096
    %v1099 = vmul.f32 %v1081, %v1097
    %1101 = vrot.lane.b32.xlu0 %v1099, 32
    %v1102 = vpop.permute.xlu0 %1101
    %v1103 = vsel %vm262, %v1102, 0
    %1105 = vmatpush.msra.mxu0 0.0
    %1106 = vmatpush.msra.mxu0 0.0
    %1107 = vmatpush.msra.mxu0 0.0
    %1108 = vmatpush.msra.mxu0 0.0
    %1109 = vmatpush.msra.mxu0 0.0
    %1110 = vmatpush.msra.mxu0 0.0
    %1111 = vmatpush.msra.mxu0 0.0
    %1112 = vmatpush.msra.mxu0 0.0
    %1113 = vmatpush.msra.mxu0 0.0
    %1114 = vmatpush.msra.mxu0 0.0
    %1115 = vmatpush.msra.mxu0 0.0
    %1116 = vmatpush.msra.mxu0 0.0
    %1117 = vmatpush.msra.mxu0 %v187
    %1118 = vmatpush.msra.mxu0 %v186
    %1119 = vmatpush.msra.mxu0 %v185
    %1120 = vmatpush.msra.mxu0 %v184
    %1121 = vmatmul.f32.gmra.mxu0 %v1103
    %v1122 = vpop.f32.mrf.mxu0
    %v1123 = vadd.f32 %v1075, %v1122
    %1124 = vdwg.mxu0
    %v1125 = vadd.f32 %v1123, %v190
    %v1126 = vmul.f32 %v1125, 0.5
    %v1127 = vtanh.pop %v1126
    %v1128 = vmul.f32 %v1127, 0.5
    %v1129 = vadd.f32 %v1128, 0.5
    %v1130 = vtanh.pop %v1125
    %v1131 = vmul.f32 %v1129, %v1021
    %1133 = vrot.lane.b32.xlu0 %v1130, 64
    %v1134 = vpop.permute.xlu0 %1133
    %v1136 = vmul.f32 %v1129, %v1134
    %1138 = vrot.lane.b32.xlu0 %v1136, 32
    %v1139 = vpop.permute.xlu0 %1138
    %v1141 = vadd.f32 %v1131, %v1139
    %v1142 = vtanh.pop %v1141
    %1144 = vrot.lane.b32.xlu0 %v1142, 64
    %v1145 = vpop.permute.xlu0 %1144
    %v1147 = vmul.f32 %v1129, %v1145
    %1150 = vrot.lane.b32.xlu0 %v1147, 64
    %v1151 = vpop.permute.xlu0 %1150
    %1154 = vrot.lane.b32.xlu0 %v1093, 32
    %v1155 = vpop.permute.xlu0 %1154
    %1158 = vrot.lane.b32.xlu0 %v1141, 64
    %v1159 = vpop.permute.xlu0 %1158
    %v1161 = vsel %vm262, %v1102, %v1151
    %v1162 = vsel %vm192, %v1161, %v1155
    %vm1163 = vcmask 785408
    %v1164 = vsel %vm1163, %v1162, %v1159
    %1165 = vst [vmem:[#allocation7] sm:$0xff] %v1164
    // Predicated region
    $region30: #{tpu_custom_call.1} parent=1 // pred_check
      _
    $region31: #{tpu_custom_call.1} parent=1 // pred_check_branch
      %1167 = sbr.rel (0) target = $region33
    $region32: #{tpu_custom_call.1} parent=1 // pred_region
      %1169 = vsyncadd [#allocation4], 0
      %s1171 = sshll.u32 [#allocation7], 4
      %s1172 = int_to_ptr.vmem [resolvable:$true] %s1171
      %s1173 = sshll.u32 %s5, 4
      %s1174 = int_to_ptr.hbm [resolvable:$true] %s1173
      %1176 = dma.vmem_to_hbm [thread:$0]  %s1172, 128, %s1174, [#allocation4]
    $region33: #{tpu_custom_call.1} parent=1 // pred_fallthru
      _
    // Predicated region
    $region34: #{tpu_custom_call.1} parent=1 // pred_check
      _
    $region35: #{tpu_custom_call.1} parent=1 // pred_check_branch
      %1178 = sbr.rel (0) target = $region37
    $region36: #{tpu_custom_call.1} parent=1 // pred_region
      %1180 = dma.done [#allocation4], 128
    $region37: #{tpu_custom_call.1} parent=1 // pred_fallthru
      _
    %1181 = vsyncpa [#allocation3], 1
    %1182 = vsyncpa [#allocation6], 1
    %1183 = vsyncpa [#allocation4], 1

</llo_original>
